<compile_context>
chip_gen: v5e
topology: v5e:2x2
jax: 0.10.0
libtpu: 0.0.40
codegen_flags: <defaults>
</compile_context>

<pallas_src>
import functools

import jax
import jax.numpy as jnp
from jax.experimental import pallas as pl
from jax.experimental.pallas import tpu as pltpu

DIM1 = 32          # dim1_og == dim1 (scale_dim1 = 1)
DIM2 = 32
MMHID = 64
FUSE_DIM = (DIM1 + 1) * (DIM2 + 1)  # 1089
NN_IN = MMHID + DIM1 + DIM2 + 2     # 130
NN_HID = 75
HPAD = 128                          # NeuralNet hidden padded to one lane tile
GATE_W = HPAD + DIM1                # 160: [w_out(64)|w_o1(32)|w_o2(32)|w_1(2)+pad(30)]
OO = DIM1 * DIM2                    # 1024 outer-product width


# ---------------------------------------------------------------------------
# host-side parameter packing
# ---------------------------------------------------------------------------
def _pack(pieces, lane, dtype=jnp.float32):
    """Stack 2-D pieces row-wise into one (rows, lane) array.

    Each piece is zero-padded to `lane` columns and to a multiple of 8 rows so
    every piece starts on an 8-sublane boundary.  Returns the packed array and
    {name: (row_offset, rows)} with plain-Python ints for static slicing.
    """
    offs, chunks, off = {}, [], 0
    for name, arr in pieces:
        a = jnp.asarray(arr, dtype)
        r, c = a.shape
        if c < lane:
            a = jnp.pad(a, ((0, 0), (0, lane - c)))
        rpad = (-r) % 8
        if rpad:
            a = jnp.pad(a, ((0, rpad), (0, 0)))
        offs[name] = (off, r)
        chunks.append(a)
        off += r + rpad
    return jnp.concatenate(chunks, axis=0), offs


def _block_diag(a, b):
    za = jnp.zeros((a.shape[0], b.shape[1]), jnp.float32)
    zb = jnp.zeros((b.shape[0], a.shape[1]), jnp.float32)
    return jnp.concatenate(
        [jnp.concatenate([a, za], axis=1),
         jnp.concatenate([zb, b], axis=1)], axis=0)


def pack_params(p):
    """Split / fuse / fold / pack the module parameters for the kernel."""
    r_one1 = MMHID + DIM1                 # 96  (o1c's appended-ones feature index)
    r_one2 = MMHID + DIM1 + 1 + DIM2      # 129 (o2c's appended-ones feature index)

    # ---- encoder1 split by the (i*33+j) outer-product index structure ------
    we1 = p["We1"].reshape(DIM1 + 1, DIM2 + 1, MMHID)
    we1_oo = we1[:DIM1, :DIM2, :].reshape(OO, MMHID)                 # (1024, 64)
    we1x = jnp.concatenate([we1[:DIM1, DIM2, :], we1[DIM1, :DIM2, :]],
                           axis=0)                                   # (64, 64)
    be1_eff = p["be1"] + we1[DIM1, DIM2, :][None, :]                 # (1, 64)

    # ---- block-diag fusion of the paired 32-wide gating matmuls ------------
    wh12 = _block_diag(p["Wh1"], p["Wh2"])                           # (64, 64)
    wo12 = _block_diag(p["Wo1"], p["Wo2"])                           # (64, 64)
    bh12 = jnp.concatenate([p["bh1"], p["bh2"]], axis=1)
    bo12 = jnp.concatenate([p["bo1"], p["bo2"]], axis=1)
    bz12 = jnp.concatenate([p["bz1"], p["bz2"]], axis=1)

    # ---- NeuralNet fc1: rows [out|o1|1|o2|1] -> stacked (128,75); ones rows
    # folded into the bias; hidden 75 zero-padded to 128 lanes ---------------
    wn1, bn1 = p["Wn1"], p["bn1"]
    padc = lambda a: jnp.pad(a, ((0, 0), (0, HPAD - NN_HID)))
    wn1_all = padc(jnp.concatenate(
        [wn1[0:MMHID], wn1[MMHID:r_one1], wn1[r_one1 + 1:r_one2]], axis=0))
    bn1_eff = padc(bn1 + wn1[r_one1][None, :] + wn1[r_one2][None, :])

    # ---- NeuralNet fc2 (gate head): cols fused to
    # [w_out(64)|w_o1(32)|w_o2(32)|w_ones(2)+zeropad(30)]; rows 75 -> 128 -----
    wn2, bn2 = p["Wn2"], p["bn2"]
    padr = lambda a: jnp.pad(a, ((0, HPAD - NN_HID), (0, 0)))
    wn2_c = jnp.concatenate([wn2[:, r_one1:r_one1 + 1], wn2[:, r_one2:r_one2 + 1]],
                            axis=1)
    bn2_c = jnp.concatenate([bn2[:, r_one1:r_one1 + 1], bn2[:, r_one2:r_one2 + 1]],
                            axis=1)
    wn2_all = padr(jnp.concatenate(
        [wn2[:, 0:MMHID], wn2[:, MMHID:r_one1], wn2[:, r_one1 + 1:r_one2],
         jnp.pad(wn2_c, ((0, 0), (0, DIM1 - 2)))], axis=1))          # (128, 160)
    bn2_all = jnp.concatenate(
        [bn2[:, 0:MMHID], bn2[:, MMHID:r_one1], bn2[:, r_one1 + 1:r_one2],
         jnp.pad(bn2_c, ((0, 0), (0, DIM1 - 2)))], axis=1)           # (1, 160)

    # ---- encoder2: rows fused to [out|o1|o2|ones(2)+zeropad(30)]; output
    # cols padded 64 -> 128 for a lane-dense store ---------------------------
    we2 = p["We2"]
    we2_c = jnp.concatenate([we2[r_one1:r_one1 + 1], we2[r_one2:r_one2 + 1]],
                            axis=0)
    we2_all = jnp.concatenate(
        [we2[0:MMHID], we2[MMHID:r_one1], we2[r_one1 + 1:r_one2],
         jnp.pad(we2_c, ((0, DIM1 - 2), (0, 0)))], axis=0)           # (160, 64)
    we2_all = jnp.pad(we2_all, ((0, 0), (0, HPAD - MMHID)))          # (160, 128)
    be2_pad = jnp.pad(p["be2"], ((0, 0), (0, HPAD - MMHID)))         # (1, 128)

    pack64, off64 = _pack([
        ("wh12", wh12), ("wo12", wo12), ("we1x", we1x),
        ("bh12", bh12), ("bz12", bz12), ("bo12", bo12), ("be1", be1_eff),
    ], MMHID)
    pack128, off128 = _pack([
        ("wn1_all", wn1_all), ("we2_all", we2_all),
        ("bn1", bn1_eff), ("be2", be2_pad),
    ], HPAD)
    pack160, off160 = _pack([
        ("wn2_all", wn2_all), ("bn2", bn2_all),
    ], GATE_W)

    # ---- big bf16 weights: [Wz1|Wz2] fused along N, encoder1's 1024x64 -----
    wzz = jnp.concatenate([p["Wz1"], p["Wz2"]], axis=1)              # (1024, 64)
    big = jnp.concatenate([wzz, we1_oo], axis=0).astype(jnp.bfloat16)  # (2048, 64)

    # ---- one-hot expansion (DMA'd once, resident): (x @ r1)[b,i*32+j]=x[b,i]
    row = jnp.arange(DIM1, dtype=jnp.int32)[:, None]
    col = jnp.arange(OO, dtype=jnp.int32)[None, :]
    r1 = (row == col // DIM2).astype(jnp.bfloat16)                   # (32, 1024)

    return dict(big=big, r1=r1,
                pack64=pack64, pack128=pack128, pack160=pack160,
                off64=off64, off128=off128, off160=off160)


# ---------------------------------------------------------------------------
# kernel
# ---------------------------------------------------------------------------
def _make_kernel(off64, off128, off160):
    def kernel(v12_ref, r1_ref, big_ref, p64_ref, p128_ref, p160_ref, out_ref):
        dot = functools.partial(jnp.dot, preferred_element_type=jnp.float32)
        sig = jax.nn.sigmoid
        relu = lambda x: jnp.maximum(x, 0.0)
        bf16 = jnp.bfloat16

        def g(ref, offs, name):          # static, 8-aligned slice of a pack
            o, r = offs[name]
            return ref[o:o + r, :]
        g64 = functools.partial(g, p64_ref, off64)
        g128 = functools.partial(g, p128_ref, off128)
        g160 = functools.partial(g, p160_ref, off160)

        def lane_tile(x):
            # (B, 32) -> (B, 1024) with result[b, c] = x[b, c % 32]
            # (replaces the r2 expansion matmul with cheap lane replication).
            x128 = jnp.concatenate([x, x, x, x], axis=1)             # (B, 128)
            return jnp.concatenate([x128] * (OO // HPAD), axis=1)    # (B, 1024)

        v12 = v12_ref[...]                                           # (B, 64) [v1|v2]
        v1 = v12[:, :DIM1]
        v2 = v12[:, DIM1:]
        r1 = r1_ref[...]                                             # (32, 1024) bf16

        # linear_h1 / linear_h2 (block-diag fused)
        h12 = relu(dot(v12, g64("wh12")) + g64("bh12"))              # (B, 64)

        # nn.Bilinear(vec1, vec2) for z1 and z2, N-fused: p[b,i*32+j]=v1[i]*v2[j]
        p = (dot(v1.astype(bf16), r1) * lane_tile(v2)).astype(bf16)  # (B,1024) bf16
        z12 = dot(p, big_ref[0:OO, :]) + g64("bz12")                 # native bf16 MXU

        # linear_o1 / linear_o2 (block-diag fused; Dropout is an eval no-op)
        o12 = relu(dot(sig(z12) * h12, g64("wo12")) + g64("bo12"))   # (B,64)=[o1|o2]
        o1 = o12[:, :DIM1]
        o2 = o12[:, DIM1:]

        # encoder1 on the (o1,1)⊗(o2,1) fusion: 1024x64 bf16 block + one 64x64
        # cross-term block; constant row folded into the bias.
        p_o = (dot(o1.astype(bf16), r1) * lane_tile(o2)).astype(bf16)
        out = relu(dot(p_o, big_ref[OO:2 * OO, :])
                   + dot(o12, g64("we1x")) + g64("be1"))             # (B, 64)

        # NeuralNet gate: one stacked fc1 (128x128) and one stacked fc2 (128x160)
        nn_in = jnp.concatenate([out, o12], axis=1)                  # (B, 128)
        hmid = relu(dot(nn_in, g128("wn1_all")) + g128("bn1"))       # (B, 128)
        w_all = sig(dot(hmid, g160("wn2_all")) + g160("bn2"))        # (B, 160)
        # w_all lanes: [w_out(64)|w_o1(32)|w_o2(32)|w_ones(2)|junk(30)].
        # The 30 junk lanes (sigmoid(0)=0.5) hit all-zero rows of we2_all,
        # so they contribute nothing — do not repurpose those lanes.

        # encoder2 on the gated skip connection: single stacked (160,128) matmul;
        # output lanes 64..127 are zero padding (lane-dense store).
        gated = jnp.concatenate([nn_in * w_all[:, :HPAD], w_all[:, HPAD:]],
                                axis=1)                              # (B, 160)
        out_ref[...] = relu(dot(gated, g128("we2_all")) + g128("be2"))

    return kernel


def _round_up(x, m):
    return ((x + m - 1) // m) * m


def bilinear_fusion(vec1, vec2, packed, *, block_b=512):
    """block_b: max batch rows per grid step (weights stay VMEM-resident)."""
    b = vec1.shape[0]
    v12 = jnp.concatenate([vec1, vec2], axis=1)                      # (b, 64)

    if b <= 8:
        tb = b                      # single step for tiny batches
    else:
        # >=2 grid steps so "parallel" shards across both v7x TensorCores;
        # 8-row aligned blocks.  Padded tail blocks read garbage v1/v2 rows,
        # which is harmless (their outputs are never stored).
        tb = min(block_b, _round_up((b + 1) // 2, 8))
    grid = (pl.cdiv(b, tb),)

    kernel = _make_kernel(packed["off64"], packed["off128"], packed["off160"])

    def w_spec(arr):                # full array, resident across the grid
        return pl.BlockSpec(arr.shape, lambda i: (0, 0))

    out = pl.pallas_call(
        kernel,
        out_shape=jax.ShapeDtypeStruct((b, HPAD), jnp.float32),
        grid=grid,
        in_specs=[
            pl.BlockSpec((tb, 2 * DIM1), lambda i: (i, 0)),
            w_spec(packed["r1"]), w_spec(packed["big"]),
            w_spec(packed["pack64"]), w_spec(packed["pack128"]),
            w_spec(packed["pack160"]),
        ],
        out_specs=pl.BlockSpec((tb, HPAD), lambda i: (i, 0)),
        compiler_params=pltpu.CompilerParams(
            dimension_semantics=("parallel",),
            vmem_limit_bytes=(48 << 20) if tb > 256 else None),
    )(v12, packed["r1"], packed["big"],
      packed["pack64"], packed["pack128"], packed["pack160"])
    return out[:, :MMHID]


# ---------------------------------------------------------------------------
# parameter construction + pure-JAX reference
# ---------------------------------------------------------------------------
def make_params(key):
    """Deterministic init (normal, std = 1/sqrt(fan_in)), analogous to init_max_weights."""
    def linear(k, fan_in, fan_out):
        kw, kb = jax.random.split(k)
        std = 1.0 / jnp.sqrt(jnp.float32(fan_in))
        w = jax.random.normal(kw, (fan_in, fan_out), jnp.float32) * std
        bias = jax.random.normal(kb, (1, fan_out), jnp.float32) * std
        return w, bias

    ks = jax.random.split(key, 10)
    p = {}
    p["Wh1"], p["bh1"] = linear(ks[0], DIM1, DIM1)
    p["Wh2"], p["bh2"] = linear(ks[1], DIM2, DIM2)

    # nn.Bilinear weight shape (out, in1, in2); flatten to ((i*32+j), k)
    def bilinear(k, out_dim):
        kw, kb = jax.random.split(k)
        std = 1.0 / jnp.sqrt(jnp.float32(DIM1))
        w3 = jax.random.normal(kw, (out_dim, DIM1, DIM2), jnp.float32) * std
        wflat = w3.reshape(out_dim, DIM1 * DIM2).T           # (1024, out)
        bias = jax.random.normal(kb, (1, out_dim), jnp.float32) * std
        return wflat, bias

    p["Wz1"], p["bz1"] = bilinear(ks[2], DIM1)
    p["Wz2"], p["bz2"] = bilinear(ks[3], DIM2)
    p["Wo1"], p["bo1"] = linear(ks[4], DIM1, DIM1)
    p["Wo2"], p["bo2"] = linear(ks[5], DIM2, DIM2)
    p["We1"], p["be1"] = linear(ks[6], FUSE_DIM, MMHID)
    p["Wn1"], p["bn1"] = linear(ks[7], NN_IN, NN_HID)
    p["Wn2"], p["bn2"] = linear(ks[8], NN_HID, NN_IN)
    p["We2"], p["be2"] = linear(ks[9], NN_IN, MMHID)
    return p


def reference(vec1, vec2, p):
    """Plain-JAX reference following the original PyTorch formulation."""
    relu = lambda x: jnp.maximum(x, 0.0)
    sig = jax.nn.sigmoid
    b = vec1.shape[0]

    h1 = relu(vec1 @ p["Wh1"] + p["bh1"])
    h2 = relu(vec2 @ p["Wh2"] + p["bh2"])
    wz1 = p["Wz1"].T.reshape(DIM1, DIM1, DIM2)   # (k, i, j)
    wz2 = p["Wz2"].T.reshape(DIM2, DIM1, DIM2)
    z1 = jnp.einsum("bi,kij,bj->bk", vec1, wz1, vec2) + p["bz1"]
    z2 = jnp.einsum("bi,kij,bj->bk", vec1, wz2, vec2) + p["bz2"]
    o1 = relu((sig(z1) * h1) @ p["Wo1"] + p["bo1"])
    o2 = relu((sig(z2) * h2) @ p["Wo2"] + p["bo2"])
    ones = jnp.ones((b, 1), jnp.float32)
    o1c = jnp.concatenate([o1, ones], axis=1)
    o2c = jnp.concatenate([o2, ones], axis=1)
    o12 = (o1c[:, :, None] * o2c[:, None, :]).reshape(b, FUSE_DIM)
    out = relu(o12 @ p["We1"] + p["be1"])
    nn_in = jnp.concatenate([out, o1c, o2c], axis=1)
    w = sig(relu(nn_in @ p["Wn1"] + p["bn1"]) @ p["Wn2"] + p["bn2"])
    gated = jnp.concatenate(
        [out * w[:, :MMHID], o1c * w[:, MMHID:MMHID + 33], o2c * w[:, MMHID + 33:]],
        axis=1,
    )
    return relu(gated @ p["We2"] + p["be2"])


if __name__ == "__main__":
    key = jax.random.PRNGKey(0)
    k1, k2, kp = jax.random.split(key, 3)
    batch = 8
    vec1 = jax.random.normal(k1, (batch, DIM1), jnp.float32)
    vec2 = jax.random.normal(k2, (batch, DIM2), jnp.float32)
    params = make_params(kp)
    packed = pack_params(params)

    out = bilinear_fusion(vec1, vec2, packed)
    out = jax.block_until_ready(out)

    ref = reference(vec1, vec2, params)
    assert out.shape == (batch, MMHID)
    # bf16 is used intentionally for the three 1024-wide matmuls -> loose check.
    assert jnp.allclose(out, ref, rtol=3e-2, atol=3e-2), float(jnp.max(jnp.abs(out - ref)))
    print("KERNEL_OK")
</pallas_src>

<mosaic_0001>
module attributes {stable_mosaic.version = 11 : i64} {
  func.func @kernel(%arg0: i32, %arg1: memref<8x64xf32, #tpu.memory_space<vmem>>, %arg2: memref<32x1024xbf16, #tpu.memory_space<vmem>>, %arg3: memref<2048x64xbf16, #tpu.memory_space<vmem>>, %arg4: memref<224x64xf32, #tpu.memory_space<vmem>>, %arg5: memref<304x128xf32, #tpu.memory_space<vmem>>, %arg6: memref<136x160xf32, #tpu.memory_space<vmem>>, %arg7: memref<8x128xf32, #tpu.memory_space<vmem>>) attributes {dimension_semantics = [#tpu.dimension_semantics<parallel>], iteration_bounds = array<i64: 1>, scalar_prefetch = 0 : i64, scratch_operands = 0 : i64, tpu.core_type = #tpu.core_type<tc>, window_params = [{transform_indices = @transform_0, window_bounds = array<i64: 8, 64>}, {pipeline_mode = #tpu.pipeline_mode<synchronous>, transform_indices = @transform_1, window_bounds = array<i64: 32, 1024>}, {pipeline_mode = #tpu.pipeline_mode<synchronous>, transform_indices = @transform_2, window_bounds = array<i64: 2048, 64>}, {pipeline_mode = #tpu.pipeline_mode<synchronous>, transform_indices = @transform_3, window_bounds = array<i64: 224, 64>}, {pipeline_mode = #tpu.pipeline_mode<synchronous>, transform_indices = @transform_4, window_bounds = array<i64: 304, 128>}, {pipeline_mode = #tpu.pipeline_mode<synchronous>, transform_indices = @transform_5, window_bounds = array<i64: 136, 160>}, {transform_indices = @transform_6, window_bounds = array<i64: 8, 128>}]} {
    %c0 = arith.constant 0 : index
    %c0_0 = arith.constant 0 : index
    %0 = vector.load %arg1[%c0, %c0_0] : memref<8x64xf32, #tpu.memory_space<vmem>>, vector<8x64xf32>
    %1 = vector.extract_strided_slice %0 {offsets = [0, 0], sizes = [8, 32], strides = [1, 1]} : vector<8x64xf32> to vector<8x32xf32>
    %2 = vector.extract_strided_slice %0 {offsets = [0, 32], sizes = [8, 32], strides = [1, 1]} : vector<8x64xf32> to vector<8x32xf32>
    %c0_1 = arith.constant 0 : index
    %c0_2 = arith.constant 0 : index
    %3 = vector.load %arg2[%c0_1, %c0_2] : memref<32x1024xbf16, #tpu.memory_space<vmem>>, vector<32x1024xbf16>
    %c0_3 = arith.constant 0 : index
    %c0_4 = arith.constant 0 : index
    %4 = vector.load %arg4[%c0_3, %c0_4] : memref<224x64xf32, #tpu.memory_space<vmem>>, vector<64x64xf32>
    %cst = arith.constant dense<0.000000e+00> : vector<8x64xf32>
    %5 = tpu.matmul %0, %4, %cst {dimension_numbers = #tpu.dot_dimension_numbers<[1], [0], [0], [1], [0, 0, 1, 1], [], []>} : vector<8x64xf32>, vector<64x64xf32>, vector<8x64xf32> -> vector<8x64xf32>
    %c192 = arith.constant 192 : index
    %c0_5 = arith.constant 0 : index
    %6 = vector.load %arg4[%c192, %c0_5] : memref<224x64xf32, #tpu.memory_space<vmem>>, vector<1x64xf32>
    %7 = vector.broadcast %6 : vector<1x64xf32> to vector<8x64xf32>
    %8 = arith.addf %5, %7 : vector<8x64xf32>
    %cst_6 = arith.constant 0.000000e+00 : f32
    %9 = vector.broadcast %cst_6 : f32 to vector<8x64xf32>
    %10 = arith.maximumf %8, %9 : vector<8x64xf32>
    %11 = arith.truncf %1 : vector<8x32xf32> to vector<8x32xbf16>
    %cst_7 = arith.constant dense<0.000000e+00> : vector<8x1024xf32>
    %12 = tpu.matmul %11, %3, %cst_7 {dimension_numbers = #tpu.dot_dimension_numbers<[1], [0], [0], [1], [0, 0, 1, 1], [], []>} : vector<8x32xbf16>, vector<32x1024xbf16>, vector<8x1024xf32> -> vector<8x1024xf32>
    %13 = tpu.concatenate %2, %2, %2, %2 in 1 : vector<8x32xf32>, vector<8x32xf32>, vector<8x32xf32>, vector<8x32xf32> -> vector<8x128xf32>
    %14 = tpu.concatenate %13, %13, %13, %13, %13, %13, %13, %13 in 1 : vector<8x128xf32>, vector<8x128xf32>, vector<8x128xf32>, vector<8x128xf32>, vector<8x128xf32>, vector<8x128xf32>, vector<8x128xf32>, vector<8x128xf32> -> vector<8x1024xf32>
    %15 = arith.mulf %12, %14 : vector<8x1024xf32>
    %16 = arith.truncf %15 : vector<8x1024xf32> to vector<8x1024xbf16>
    %c0_8 = arith.constant 0 : index
    %c0_9 = arith.constant 0 : index
    %17 = vector.load %arg3[%c0_8, %c0_9] : memref<2048x64xbf16, #tpu.memory_space<vmem>>, vector<1024x64xbf16>
    %cst_10 = arith.constant dense<0.000000e+00> : vector<8x64xf32>
    %18 = tpu.matmul %16, %17, %cst_10 {dimension_numbers = #tpu.dot_dimension_numbers<[1], [0], [0], [1], [0, 0, 1, 1], [], []>} : vector<8x1024xbf16>, vector<1024x64xbf16>, vector<8x64xf32> -> vector<8x64xf32>
    %c200 = arith.constant 200 : index
    %c0_11 = arith.constant 0 : index
    %19 = vector.load %arg4[%c200, %c0_11] : memref<224x64xf32, #tpu.memory_space<vmem>>, vector<1x64xf32>
    %20 = vector.broadcast %19 : vector<1x64xf32> to vector<8x64xf32>
    %21 = arith.addf %18, %20 : vector<8x64xf32>
    %22 = arith.negf %21 : vector<8x64xf32>
    %23 = math.exp %22 : vector<8x64xf32>
    %cst_12 = arith.constant 1.000000e+00 : f32
    %24 = vector.broadcast %cst_12 : f32 to vector<8x64xf32>
    %25 = arith.addf %24, %23 : vector<8x64xf32>
    %26 = arith.divf %24, %25 : vector<8x64xf32>
    %27 = arith.mulf %26, %10 : vector<8x64xf32>
    %c64 = arith.constant 64 : index
    %c0_13 = arith.constant 0 : index
    %28 = vector.load %arg4[%c64, %c0_13] : memref<224x64xf32, #tpu.memory_space<vmem>>, vector<64x64xf32>
    %cst_14 = arith.constant dense<0.000000e+00> : vector<8x64xf32>
    %29 = tpu.matmul %27, %28, %cst_14 {dimension_numbers = #tpu.dot_dimension_numbers<[1], [0], [0], [1], [0, 0, 1, 1], [], []>} : vector<8x64xf32>, vector<64x64xf32>, vector<8x64xf32> -> vector<8x64xf32>
    %c208 = arith.constant 208 : index
    %c0_15 = arith.constant 0 : index
    %30 = vector.load %arg4[%c208, %c0_15] : memref<224x64xf32, #tpu.memory_space<vmem>>, vector<1x64xf32>
    %31 = vector.broadcast %30 : vector<1x64xf32> to vector<8x64xf32>
    %32 = arith.addf %29, %31 : vector<8x64xf32>
    %cst_16 = arith.constant 0.000000e+00 : f32
    %33 = vector.broadcast %cst_16 : f32 to vector<8x64xf32>
    %34 = arith.maximumf %32, %33 : vector<8x64xf32>
    %35 = vector.extract_strided_slice %34 {offsets = [0, 0], sizes = [8, 32], strides = [1, 1]} : vector<8x64xf32> to vector<8x32xf32>
    %36 = vector.extract_strided_slice %34 {offsets = [0, 32], sizes = [8, 32], strides = [1, 1]} : vector<8x64xf32> to vector<8x32xf32>
    %37 = arith.truncf %35 : vector<8x32xf32> to vector<8x32xbf16>
    %cst_17 = arith.constant dense<0.000000e+00> : vector<8x1024xf32>
    %38 = tpu.matmul %37, %3, %cst_17 {dimension_numbers = #tpu.dot_dimension_numbers<[1], [0], [0], [1], [0, 0, 1, 1], [], []>} : vector<8x32xbf16>, vector<32x1024xbf16>, vector<8x1024xf32> -> vector<8x1024xf32>
    %39 = tpu.concatenate %36, %36, %36, %36 in 1 : vector<8x32xf32>, vector<8x32xf32>, vector<8x32xf32>, vector<8x32xf32> -> vector<8x128xf32>
    %40 = tpu.concatenate %39, %39, %39, %39, %39, %39, %39, %39 in 1 : vector<8x128xf32>, vector<8x128xf32>, vector<8x128xf32>, vector<8x128xf32>, vector<8x128xf32>, vector<8x128xf32>, vector<8x128xf32>, vector<8x128xf32> -> vector<8x1024xf32>
    %41 = arith.mulf %38, %40 : vector<8x1024xf32>
    %42 = arith.truncf %41 : vector<8x1024xf32> to vector<8x1024xbf16>
    %c1024 = arith.constant 1024 : index
    %c0_18 = arith.constant 0 : index
    %43 = vector.load %arg3[%c1024, %c0_18] : memref<2048x64xbf16, #tpu.memory_space<vmem>>, vector<1024x64xbf16>
    %cst_19 = arith.constant dense<0.000000e+00> : vector<8x64xf32>
    %44 = tpu.matmul %42, %43, %cst_19 {dimension_numbers = #tpu.dot_dimension_numbers<[1], [0], [0], [1], [0, 0, 1, 1], [], []>} : vector<8x1024xbf16>, vector<1024x64xbf16>, vector<8x64xf32> -> vector<8x64xf32>
    %c128 = arith.constant 128 : index
    %c0_20 = arith.constant 0 : index
    %45 = vector.load %arg4[%c128, %c0_20] : memref<224x64xf32, #tpu.memory_space<vmem>>, vector<64x64xf32>
    %cst_21 = arith.constant dense<0.000000e+00> : vector<8x64xf32>
    %46 = tpu.matmul %34, %45, %cst_21 {dimension_numbers = #tpu.dot_dimension_numbers<[1], [0], [0], [1], [0, 0, 1, 1], [], []>} : vector<8x64xf32>, vector<64x64xf32>, vector<8x64xf32> -> vector<8x64xf32>
    %47 = arith.addf %44, %46 : vector<8x64xf32>
    %c216 = arith.constant 216 : index
    %c0_22 = arith.constant 0 : index
    %48 = vector.load %arg4[%c216, %c0_22] : memref<224x64xf32, #tpu.memory_space<vmem>>, vector<1x64xf32>
    %49 = vector.broadcast %48 : vector<1x64xf32> to vector<8x64xf32>
    %50 = arith.addf %47, %49 : vector<8x64xf32>
    %cst_23 = arith.constant 0.000000e+00 : f32
    %51 = vector.broadcast %cst_23 : f32 to vector<8x64xf32>
    %52 = arith.maximumf %50, %51 : vector<8x64xf32>
    %53 = tpu.concatenate %52, %34 in 1 : vector<8x64xf32>, vector<8x64xf32> -> vector<8x128xf32>
    %c0_24 = arith.constant 0 : index
    %c0_25 = arith.constant 0 : index
    %54 = vector.load %arg5[%c0_24, %c0_25] : memref<304x128xf32, #tpu.memory_space<vmem>>, vector<128x128xf32>
    %cst_26 = arith.constant dense<0.000000e+00> : vector<8x128xf32>
    %55 = tpu.matmul %53, %54, %cst_26 {dimension_numbers = #tpu.dot_dimension_numbers<[1], [0], [0], [1], [0, 0, 1, 1], [], []>} : vector<8x128xf32>, vector<128x128xf32>, vector<8x128xf32> -> vector<8x128xf32>
    %c288 = arith.constant 288 : index
    %c0_27 = arith.constant 0 : index
    %56 = vector.load %arg5[%c288, %c0_27] : memref<304x128xf32, #tpu.memory_space<vmem>>, vector<1x128xf32>
    %57 = vector.broadcast %56 : vector<1x128xf32> to vector<8x128xf32>
    %58 = arith.addf %55, %57 : vector<8x128xf32>
    %cst_28 = arith.constant 0.000000e+00 : f32
    %59 = vector.broadcast %cst_28 : f32 to vector<8x128xf32>
    %60 = arith.maximumf %58, %59 : vector<8x128xf32>
    %c0_29 = arith.constant 0 : index
    %c0_30 = arith.constant 0 : index
    %61 = vector.load %arg6[%c0_29, %c0_30] : memref<136x160xf32, #tpu.memory_space<vmem>>, vector<128x160xf32>
    %cst_31 = arith.constant dense<0.000000e+00> : vector<8x160xf32>
    %62 = tpu.matmul %60, %61, %cst_31 {dimension_numbers = #tpu.dot_dimension_numbers<[1], [0], [0], [1], [0, 0, 1, 1], [], []>} : vector<8x128xf32>, vector<128x160xf32>, vector<8x160xf32> -> vector<8x160xf32>
    %c128_32 = arith.constant 128 : index
    %c0_33 = arith.constant 0 : index
    %63 = vector.load %arg6[%c128_32, %c0_33] : memref<136x160xf32, #tpu.memory_space<vmem>>, vector<1x160xf32>
    %64 = vector.broadcast %63 : vector<1x160xf32> to vector<8x160xf32>
    %65 = arith.addf %62, %64 : vector<8x160xf32>
    %66 = arith.negf %65 : vector<8x160xf32>
    %67 = math.exp %66 : vector<8x160xf32>
    %cst_34 = arith.constant 1.000000e+00 : f32
    %68 = vector.broadcast %cst_34 : f32 to vector<8x160xf32>
    %69 = arith.addf %68, %67 : vector<8x160xf32>
    %70 = arith.divf %68, %69 : vector<8x160xf32>
    %71 = vector.extract_strided_slice %70 {offsets = [0, 0], sizes = [8, 128], strides = [1, 1]} : vector<8x160xf32> to vector<8x128xf32>
    %72 = arith.mulf %53, %71 : vector<8x128xf32>
    %73 = vector.extract_strided_slice %70 {offsets = [0, 128], sizes = [8, 32], strides = [1, 1]} : vector<8x160xf32> to vector<8x32xf32>
    %74 = tpu.concatenate %72, %73 in 1 : vector<8x128xf32>, vector<8x32xf32> -> vector<8x160xf32>
    %c128_35 = arith.constant 128 : index
    %c0_36 = arith.constant 0 : index
    %75 = vector.load %arg5[%c128_35, %c0_36] : memref<304x128xf32, #tpu.memory_space<vmem>>, vector<160x128xf32>
    %cst_37 = arith.constant dense<0.000000e+00> : vector<8x128xf32>
    %76 = tpu.matmul %74, %75, %cst_37 {dimension_numbers = #tpu.dot_dimension_numbers<[1], [0], [0], [1], [0, 0, 1, 1], [], []>} : vector<8x160xf32>, vector<160x128xf32>, vector<8x128xf32> -> vector<8x128xf32>
    %c296 = arith.constant 296 : index
    %c0_38 = arith.constant 0 : index
    %77 = vector.load %arg5[%c296, %c0_38] : memref<304x128xf32, #tpu.memory_space<vmem>>, vector<1x128xf32>
    %78 = vector.broadcast %77 : vector<1x128xf32> to vector<8x128xf32>
    %79 = arith.addf %76, %78 : vector<8x128xf32>
    %cst_39 = arith.constant 0.000000e+00 : f32
    %80 = vector.broadcast %cst_39 : f32 to vector<8x128xf32>
    %81 = arith.maximumf %79, %80 : vector<8x128xf32>
    %c0_40 = arith.constant 0 : index
    %c0_41 = arith.constant 0 : index
    %82 = vector.load %arg7[%c0_40, %c0_41] : memref<8x128xf32, #tpu.memory_space<vmem>>, vector<8x128xf32>
    tpu.vector_store %arg7[%c0_40, %c0_41], %81 {strides = array<i32>} : memref<8x128xf32, #tpu.memory_space<vmem>>, vector<8x128xf32>,
    return
  }
  func.func @transform_0(%arg0: i32) -> (i32, i32) {
    %c0_i32 = arith.constant 0 : i32
    %c0_i32_0 = arith.constant 0 : i32
    return %arg0, %c0_i32 : i32, i32
  }
  func.func @transform_1(%arg0: i32) -> (i32, i32) {
    %c0_i32 = arith.constant 0 : i32
    %c0_i32_0 = arith.constant 0 : i32
    %c0_i32_1 = arith.constant 0 : i32
    return %c0_i32, %c0_i32_0 : i32, i32
  }
  func.func @transform_2(%arg0: i32) -> (i32, i32) {
    %c0_i32 = arith.constant 0 : i32
    %c0_i32_0 = arith.constant 0 : i32
    %c0_i32_1 = arith.constant 0 : i32
    return %c0_i32, %c0_i32_0 : i32, i32
  }
  func.func @transform_3(%arg0: i32) -> (i32, i32) {
    %c0_i32 = arith.constant 0 : i32
    %c0_i32_0 = arith.constant 0 : i32
    %c0_i32_1 = arith.constant 0 : i32
    return %c0_i32, %c0_i32_0 : i32, i32
  }
  func.func @transform_4(%arg0: i32) -> (i32, i32) {
    %c0_i32 = arith.constant 0 : i32
    %c0_i32_0 = arith.constant 0 : i32
    %c0_i32_1 = arith.constant 0 : i32
    return %c0_i32, %c0_i32_0 : i32, i32
  }
  func.func @transform_5(%arg0: i32) -> (i32, i32) {
    %c0_i32 = arith.constant 0 : i32
    %c0_i32_0 = arith.constant 0 : i32
    %c0_i32_1 = arith.constant 0 : i32
    return %c0_i32, %c0_i32_0 : i32, i32
  }
  func.func @transform_6(%arg0: i32) -> (i32, i32) {
    %c0_i32 = arith.constant 0 : i32
    %c0_i32_0 = arith.constant 0 : i32
    return %arg0, %c0_i32 : i32, i32
  }
}

</mosaic_0001>

<llo_original>
// kernel: tpu_custom_call.1
$region0: #{tpu_custom_call.1}
  #allocation0 [shape = 'u32[]', space=smem, size = 0x4, offset = 0x4, fixed_abs, tag = 'smem constant byte address 0x4 - core index']
  #allocation1 [shape = 'u32[72,128]{1,0:T(1,128)}', space=vmem, size = 0x9000, scoped, tag = 'internal scratch']
  %s0 = inlined_call_operand.vmem [shape: f32[8,64], index: 0, kind: input, shape index: {}]
  %s1 = inlined_call_operand.vmem [shape: bf16[32,1024], index: 1, kind: input, shape index: {}]
  %s2 = inlined_call_operand.vmem [shape: bf16[2048,64], index: 2, kind: input, shape index: {}]
  %s3 = inlined_call_operand.vmem [shape: f32[224,64], index: 3, kind: input, shape index: {}]
  %s4 = inlined_call_operand.vmem [shape: f32[304,128], index: 4, kind: input, shape index: {}]
  %s5 = inlined_call_operand.vmem [shape: f32[136,160], index: 5, kind: input, shape index: {}]
  %s6 = inlined_call_operand.hbm [shape: f32[8,128], index: 6, kind: output, shape index: {}]
  %s7 = sld [smem:[#allocation0]]
  $region34: #{tpu_custom_call.1} parent=0
    _
  %s9 = ssub.s32 1, %s7
  %s10 = scalar_select 0, %s9, %s7
  $region1: #{tpu_custom_call.1} parent=0
    #allocation2 [shape = 'u8[4096]{0}', space=vmem, size = 0x1000, scoped, tag = 'output window, operand 0, single buffered']
    #allocation3 [shape = 's32[1]{0}', space=sflag, size = 0x4, scoped, tag = 'scoped memory for tpu_custom_call.1']
    %11 = vsyncpa [#allocation3], 0
    // Predicated region
    $region2: #{tpu_custom_call.1} parent=1 // pred_check
      _
    $region3: #{tpu_custom_call.1} parent=1 // pred_check_branch
      %13 = sbr.rel (0) target = $region5
    $region4: #{tpu_custom_call.1} parent=1 // pred_region
      _
    $region5: #{tpu_custom_call.1} parent=1 // pred_fallthru
      _
    // Predicated region
    $region6: #{tpu_custom_call.1} parent=1 // pred_check
      _
    $region7: #{tpu_custom_call.1} parent=1 // pred_check_branch
      %15 = sbr.rel (0) target = $region9
    $region8: #{tpu_custom_call.1} parent=1 // pred_region
      _
    $region9: #{tpu_custom_call.1} parent=1 // pred_fallthru
      _
    // Predicated region
    $region10: #{tpu_custom_call.1} parent=1 // pred_check
      _
    $region11: #{tpu_custom_call.1} parent=1 // pred_check_branch
      %17 = sbr.rel (0) target = $region13
    $region12: #{tpu_custom_call.1} parent=1 // pred_region
      _
    $region13: #{tpu_custom_call.1} parent=1 // pred_fallthru
      _
    // Predicated region
    $region14: #{tpu_custom_call.1} parent=1 // pred_check
      _
    $region15: #{tpu_custom_call.1} parent=1 // pred_check_branch
      %19 = sbr.rel (0) target = $region17
    $region16: #{tpu_custom_call.1} parent=1 // pred_region
      _
    $region17: #{tpu_custom_call.1} parent=1 // pred_fallthru
      _
    // Predicated region
    $region18: #{tpu_custom_call.1} parent=1 // pred_check
      _
    $region19: #{tpu_custom_call.1} parent=1 // pred_check_branch
      %21 = sbr.rel (0) target = $region21
    $region20: #{tpu_custom_call.1} parent=1 // pred_region
      _
    $region21: #{tpu_custom_call.1} parent=1 // pred_fallthru
      _
    // Predicated region
    $region22: #{tpu_custom_call.1} parent=1 // pred_check
      _
    $region23: #{tpu_custom_call.1} parent=1 // pred_check_branch
      %23 = sbr.rel (0) target = $region25
    $region24: #{tpu_custom_call.1} parent=1 // pred_region
      _
    $region25: #{tpu_custom_call.1} parent=1 // pred_fallthru
      _
    %v25 = vld [vmem:[%s0] sm:$0xff]
    %v26 = vld [vmem:[%s1] sm:$0xff]
    %v27 = vld [vmem:[%s1 + $0x8] sm:$0xff]
    %v28 = vld [vmem:[%s1 + $0x10] sm:$0xff]
    %v29 = vld [vmem:[%s1 + $0x18] sm:$0xff]
    %v30 = vld [vmem:[%s1 + $0x20] sm:$0xff]
    %v31 = vld [vmem:[%s1 + $0x28] sm:$0xff]
    %v32 = vld [vmem:[%s1 + $0x30] sm:$0xff]
    %v33 = vld [vmem:[%s1 + $0x38] sm:$0xff]
    %v34 = vld [vmem:[%s1 + $0x40] sm:$0xff]
    %v35 = vld [vmem:[%s1 + $0x48] sm:$0xff]
    %v36 = vld [vmem:[%s1 + $0x50] sm:$0xff]
    %v37 = vld [vmem:[%s1 + $0x58] sm:$0xff]
    %v38 = vld [vmem:[%s1 + $0x60] sm:$0xff]
    %v39 = vld [vmem:[%s1 + $0x68] sm:$0xff]
    %v40 = vld [vmem:[%s1 + $0x70] sm:$0xff]
    %v41 = vld [vmem:[%s1 + $0x78] sm:$0xff]
    %v42 = vld [vmem:[%s3] sm:$0xff]
    %v43 = vld [vmem:[%s3 + $0x8] sm:$0xff]
    %v44 = vld [vmem:[%s3 + $0x10] sm:$0xff]
    %v45 = vld [vmem:[%s3 + $0x18] sm:$0xff]
    %v46 = vld [vmem:[%s3 + $0x20] sm:$0xff]
    %v47 = vld [vmem:[%s3 + $0x28] sm:$0xff]
    %v48 = vld [vmem:[%s3 + $0x30] sm:$0xff]
    %v49 = vld [vmem:[%s3 + $0x38] sm:$0xff]
    %v50 = vld [vmem:[%s3 + $0xc0] sm:$0x1]
    %v51 = vperm.slane %v50, 0
    %vm52 = vcmask 523264
    %v54 = vsel %vm52, %v25, 0
    %56 = vmatpush.msra.mxu0 0.0
    %57 = vmatpush.msra.mxu0 0.0
    %58 = vmatpush.msra.mxu0 0.0
    %59 = vmatpush.msra.mxu0 0.0
    %60 = vmatpush.msra.mxu0 0.0
    %61 = vmatpush.msra.mxu0 0.0
    %62 = vmatpush.msra.mxu0 0.0
    %63 = vmatpush.msra.mxu0 0.0
    %64 = vmatpush.msra.mxu0 %v49
    %65 = vmatpush.msra.mxu0 %v48
    %66 = vmatpush.msra.mxu0 %v47
    %67 = vmatpush.msra.mxu0 %v46
    %68 = vmatpush.msra.mxu0 %v45
    %69 = vmatpush.msra.mxu0 %v44
    %70 = vmatpush.msra.mxu0 %v43
    %71 = vmatpush.msra.mxu0 %v42
    %72 = vmatmul.f32.gmra.mxu0 %v54
    %v73 = vpop.f32.mrf.mxu0
    %v74 = vadd.f32 %v51, %v73
    %75 = vdwg.mxu0
    %v76 = vmax.f32 %v74, 0.0
    %v77 = vpack.c.bf16 %v25, %v25
    %v94 = vunpack.c.l.b16 %v26
    %v95 = vunpack.c.h.b16 %v26
    %v96 = vunpack.c.l.b16 %v27
    %v97 = vunpack.c.h.b16 %v27
    %v98 = vunpack.c.l.b16 %v28
    %v99 = vunpack.c.h.b16 %v28
    %v100 = vunpack.c.l.b16 %v29
    %v101 = vunpack.c.h.b16 %v29
    %v102 = vunpack.c.l.b16 %v30
    %v103 = vunpack.c.h.b16 %v30
    %v104 = vunpack.c.l.b16 %v31
    %v105 = vunpack.c.h.b16 %v31
    %v106 = vunpack.c.l.b16 %v32
    %v107 = vunpack.c.h.b16 %v32
    %v108 = vunpack.c.l.b16 %v33
    %v109 = vunpack.c.h.b16 %v33
    %v110 = vunpack.c.l.b16 %v34
    %v111 = vunpack.c.h.b16 %v34
    %v112 = vunpack.c.l.b16 %v35
    %v113 = vunpack.c.h.b16 %v35
    %v114 = vunpack.c.l.b16 %v36
    %v115 = vunpack.c.h.b16 %v36
    %v116 = vunpack.c.l.b16 %v37
    %v117 = vunpack.c.h.b16 %v37
    %v118 = vunpack.c.l.b16 %v38
    %v119 = vunpack.c.h.b16 %v38
    %v120 = vunpack.c.l.b16 %v39
    %v121 = vunpack.c.h.b16 %v39
    %v122 = vunpack.c.l.b16 %v40
    %v123 = vunpack.c.h.b16 %v40
    %v124 = vunpack.c.l.b16 %v41
    %v125 = vunpack.c.h.b16 %v41
    %v126 = vpack.c.b16 %v102, %v94
    %v127 = vpack.c.b16 %v103, %v95
    %v128 = vpack.c.b16 %v104, %v96
    %v129 = vpack.c.b16 %v105, %v97
    %v130 = vpack.c.b16 %v106, %v98
    %v131 = vpack.c.b16 %v107, %v99
    %v132 = vpack.c.b16 %v108, %v100
    %v133 = vpack.c.b16 %v109, %v101
    %v134 = vpack.c.b16 %v118, %v110
    %v135 = vpack.c.b16 %v119, %v111
    %v136 = vpack.c.b16 %v120, %v112
    %v137 = vpack.c.b16 %v121, %v113
    %v138 = vpack.c.b16 %v122, %v114
    %v139 = vpack.c.b16 %v123, %v115
    %v140 = vpack.c.b16 %v124, %v116
    %v141 = vpack.c.b16 %v125, %v117
    %vm158 = vcmask 261120
    %v160 = vsel %vm158, %v77, 0
    %162 = vmatpush.bf16.msra.mxu0 0
    %163 = vmatpush.bf16.msra.mxu0 0
    %164 = vmatpush.bf16.msra.mxu0 0
    %165 = vmatpush.bf16.msra.mxu0 0
    %166 = vmatpush.bf16.msra.mxu0 0
    %167 = vmatpush.bf16.msra.mxu0 0
    %168 = vmatpush.bf16.msra.mxu0 %v134
    %169 = vmatpush.bf16.msra.mxu0 %v126
    %170 = vmatmul.bf16.gmra.mxu0 %v160
    %v171 = vpop.f32.mrf.mxu0
    %v172 = vadd.f32 0.0, %v171
    %v173 = vpop.f32.mrf.mxu0
    %174 = vdwg.mxu0
    %175 = vmatpush.bf16.msra.mxu0 0
    %176 = vmatpush.bf16.msra.mxu0 0
    %177 = vmatpush.bf16.msra.mxu0 0
    %178 = vmatpush.bf16.msra.mxu0 0
    %179 = vmatpush.bf16.msra.mxu0 0
    %180 = vmatpush.bf16.msra.mxu0 0
    %181 = vmatpush.bf16.msra.mxu0 %v135
    %182 = vmatpush.bf16.msra.mxu0 %v127
    %183 = vmatmul.bf16.gmra.mxu0 %v160
    %v184 = vpop.f32.mrf.mxu0
    %v185 = vadd.f32 0.0, %v184
    %v186 = vpop.f32.mrf.mxu0
    %187 = vdwg.mxu0
    %188 = vmatpush.bf16.msra.mxu0 0
    %189 = vmatpush.bf16.msra.mxu0 0
    %190 = vmatpush.bf16.msra.mxu0 0
    %191 = vmatpush.bf16.msra.mxu0 0
    %192 = vmatpush.bf16.msra.mxu0 0
    %193 = vmatpush.bf16.msra.mxu0 0
    %194 = vmatpush.bf16.msra.mxu0 %v136
    %195 = vmatpush.bf16.msra.mxu0 %v128
    %196 = vmatmul.bf16.gmra.mxu0 %v160
    %v197 = vpop.f32.mrf.mxu0
    %v198 = vadd.f32 0.0, %v197
    %v199 = vpop.f32.mrf.mxu0
    %200 = vdwg.mxu0
    %201 = vmatpush.bf16.msra.mxu0 0
    %202 = vmatpush.bf16.msra.mxu0 0
    %203 = vmatpush.bf16.msra.mxu0 0
    %204 = vmatpush.bf16.msra.mxu0 0
    %205 = vmatpush.bf16.msra.mxu0 0
    %206 = vmatpush.bf16.msra.mxu0 0
    %207 = vmatpush.bf16.msra.mxu0 %v137
    %208 = vmatpush.bf16.msra.mxu0 %v129
    %209 = vmatmul.bf16.gmra.mxu0 %v160
    %v210 = vpop.f32.mrf.mxu0
    %v211 = vadd.f32 0.0, %v210
    %v212 = vpop.f32.mrf.mxu0
    %213 = vdwg.mxu0
    %214 = vmatpush.bf16.msra.mxu0 0
    %215 = vmatpush.bf16.msra.mxu0 0
    %216 = vmatpush.bf16.msra.mxu0 0
    %217 = vmatpush.bf16.msra.mxu0 0
    %218 = vmatpush.bf16.msra.mxu0 0
    %219 = vmatpush.bf16.msra.mxu0 0
    %220 = vmatpush.bf16.msra.mxu0 %v138
    %221 = vmatpush.bf16.msra.mxu0 %v130
    %222 = vmatmul.bf16.gmra.mxu0 %v160
    %v223 = vpop.f32.mrf.mxu0
    %v224 = vadd.f32 0.0, %v223
    %v225 = vpop.f32.mrf.mxu0
    %226 = vdwg.mxu0
    %227 = vmatpush.bf16.msra.mxu0 0
    %228 = vmatpush.bf16.msra.mxu0 0
    %229 = vmatpush.bf16.msra.mxu0 0
    %230 = vmatpush.bf16.msra.mxu0 0
    %231 = vmatpush.bf16.msra.mxu0 0
    %232 = vmatpush.bf16.msra.mxu0 0
    %233 = vmatpush.bf16.msra.mxu0 %v139
    %234 = vmatpush.bf16.msra.mxu0 %v131
    %235 = vmatmul.bf16.gmra.mxu0 %v160
    %v236 = vpop.f32.mrf.mxu0
    %v237 = vadd.f32 0.0, %v236
    %v238 = vpop.f32.mrf.mxu0
    %239 = vdwg.mxu0
    %240 = vmatpush.bf16.msra.mxu0 0
    %241 = vmatpush.bf16.msra.mxu0 0
    %242 = vmatpush.bf16.msra.mxu0 0
    %243 = vmatpush.bf16.msra.mxu0 0
    %244 = vmatpush.bf16.msra.mxu0 0
    %245 = vmatpush.bf16.msra.mxu0 0
    %246 = vmatpush.bf16.msra.mxu0 %v140
    %247 = vmatpush.bf16.msra.mxu0 %v132
    %248 = vmatmul.bf16.gmra.mxu0 %v160
    %v249 = vpop.f32.mrf.mxu0
    %v250 = vadd.f32 0.0, %v249
    %v251 = vpop.f32.mrf.mxu0
    %252 = vdwg.mxu0
    %253 = vmatpush.bf16.msra.mxu0 0
    %254 = vmatpush.bf16.msra.mxu0 0
    %255 = vmatpush.bf16.msra.mxu0 0
    %256 = vmatpush.bf16.msra.mxu0 0
    %257 = vmatpush.bf16.msra.mxu0 0
    %258 = vmatpush.bf16.msra.mxu0 0
    %259 = vmatpush.bf16.msra.mxu0 %v141
    %260 = vmatpush.bf16.msra.mxu0 %v133
    %261 = vmatmul.bf16.gmra.mxu0 %v160
    %v262 = vpop.f32.mrf.mxu0
    %v263 = vadd.f32 0.0, %v262
    %v264 = vpop.f32.mrf.mxu0
    %265 = vdwg.mxu0
    %266 = vrot.lane.b32.xlu0 %v25, 96
    %v267 = vpop.permute.xlu0 %266
    %269 = vrot.lane.b32.xlu0 %v25, 32
    %v270 = vpop.permute.xlu0 %269
    %272 = vrot.lane.b32.xlu0 %v25, 64
    %v273 = vpop.permute.xlu0 %272
    %v275 = vsel %vm158, %v267, %v25
    %v276 = vsel %vm52, %v275, %v270
    %vm277 = vcmask 785408
    %v278 = vsel %vm277, %v276, %v273
    %v279 = vmul.f32 %v172, %v278
    %v280 = vmul.f32 %v185, %v278
    %v281 = vmul.f32 %v198, %v278
    %v282 = vmul.f32 %v211, %v278
    %v283 = vmul.f32 %v224, %v278
    %v284 = vmul.f32 %v237, %v278
    %v285 = vmul.f32 %v250, %v278
    %v286 = vmul.f32 %v263, %v278
    %v287 = vpack.c.bf16 %v279, %v279
    %v288 = vpack.c.bf16 %v280, %v280
    %v289 = vpack.c.bf16 %v281, %v281
    %v290 = vpack.c.bf16 %v282, %v282
    %v291 = vpack.c.bf16 %v283, %v283
    %v292 = vpack.c.bf16 %v284, %v284
    %v293 = vpack.c.bf16 %v285, %v285
    %v294 = vpack.c.bf16 %v286, %v286
    %v295 = vld [vmem:[%s2] sm:$0xf]
    %v296 = vld [vmem:[%s2 + $0x4] sm:$0xf]
    %v297 = vld [vmem:[%s2 + $0x8] sm:$0xf]
    %v298 = vld [vmem:[%s2 + $0xc] sm:$0xf]
    %v299 = vld [vmem:[%s2 + $0x10] sm:$0xf]
    %v300 = vld [vmem:[%s2 + $0x14] sm:$0xf]
    %v301 = vld [vmem:[%s2 + $0x18] sm:$0xf]
    %v302 = vld [vmem:[%s2 + $0x1c] sm:$0xf]
    %v303 = vld [vmem:[%s2 + $0x20] sm:$0xf]
    %v304 = vld [vmem:[%s2 + $0x24] sm:$0xf]
    %v305 = vld [vmem:[%s2 + $0x28] sm:$0xf]
    %v306 = vld [vmem:[%s2 + $0x2c] sm:$0xf]
    %v307 = vld [vmem:[%s2 + $0x30] sm:$0xf]
    %v308 = vld [vmem:[%s2 + $0x34] sm:$0xf]
    %v309 = vld [vmem:[%s2 + $0x38] sm:$0xf]
    %v310 = vld [vmem:[%s2 + $0x3c] sm:$0xf]
    %v311 = vld [vmem:[%s2 + $0x40] sm:$0xf]
    %v312 = vld [vmem:[%s2 + $0x44] sm:$0xf]
    %v313 = vld [vmem:[%s2 + $0x48] sm:$0xf]
    %v314 = vld [vmem:[%s2 + $0x4c] sm:$0xf]
    %v315 = vld [vmem:[%s2 + $0x50] sm:$0xf]
    %v316 = vld [vmem:[%s2 + $0x54] sm:$0xf]
    %v317 = vld [vmem:[%s2 + $0x58] sm:$0xf]
    %v318 = vld [vmem:[%s2 + $0x5c] sm:$0xf]
    %v319 = vld [vmem:[%s2 + $0x60] sm:$0xf]
    %v320 = vld [vmem:[%s2 + $0x64] sm:$0xf]
    %v321 = vld [vmem:[%s2 + $0x68] sm:$0xf]
    %v322 = vld [vmem:[%s2 + $0x6c] sm:$0xf]
    %v323 = vld [vmem:[%s2 + $0x70] sm:$0xf]
    %v324 = vld [vmem:[%s2 + $0x74] sm:$0xf]
    %v325 = vld [vmem:[%s2 + $0x78] sm:$0xf]
    %v326 = vld [vmem:[%s2 + $0x7c] sm:$0xf]
    %v327 = vld [vmem:[%s2 + $0x80] sm:$0xf]
    %v328 = vld [vmem:[%s2 + $0x84] sm:$0xf]
    %v329 = vld [vmem:[%s2 + $0x88] sm:$0xf]
    %v330 = vld [vmem:[%s2 + $0x8c] sm:$0xf]
    %v331 = vld [vmem:[%s2 + $0x90] sm:$0xf]
    %v332 = vld [vmem:[%s2 + $0x94] sm:$0xf]
    %v333 = vld [vmem:[%s2 + $0x98] sm:$0xf]
    %v334 = vld [vmem:[%s2 + $0x9c] sm:$0xf]
    %v335 = vld [vmem:[%s2 + $0xa0] sm:$0xf]
    %v336 = vld [vmem:[%s2 + $0xa4] sm:$0xf]
    %v337 = vld [vmem:[%s2 + $0xa8] sm:$0xf]
    %v338 = vld [vmem:[%s2 + $0xac] sm:$0xf]
    %v339 = vld [vmem:[%s2 + $0xb0] sm:$0xf]
    %v340 = vld [vmem:[%s2 + $0xb4] sm:$0xf]
    %v341 = vld [vmem:[%s2 + $0xb8] sm:$0xf]
    %v342 = vld [vmem:[%s2 + $0xbc] sm:$0xf]
    %v343 = vld [vmem:[%s2 + $0xc0] sm:$0xf]
    %v344 = vld [vmem:[%s2 + $0xc4] sm:$0xf]
    %v345 = vld [vmem:[%s2 + $0xc8] sm:$0xf]
    %v346 = vld [vmem:[%s2 + $0xcc] sm:$0xf]
    %v347 = vld [vmem:[%s2 + $0xd0] sm:$0xf]
    %v348 = vld [vmem:[%s2 + $0xd4] sm:$0xf]
    %v349 = vld [vmem:[%s2 + $0xd8] sm:$0xf]
    %v350 = vld [vmem:[%s2 + $0xdc] sm:$0xf]
    %v351 = vld [vmem:[%s2 + $0xe0] sm:$0xf]
    %v352 = vld [vmem:[%s2 + $0xe4] sm:$0xf]
    %v353 = vld [vmem:[%s2 + $0xe8] sm:$0xf]
    %v354 = vld [vmem:[%s2 + $0xec] sm:$0xf]
    %v355 = vld [vmem:[%s2 + $0xf0] sm:$0xf]
    %v356 = vld [vmem:[%s2 + $0xf4] sm:$0xf]
    %v357 = vld [vmem:[%s2 + $0xf8] sm:$0xf]
    %v358 = vld [vmem:[%s2 + $0xfc] sm:$0xf]
    %v359 = vld [vmem:[%s2 + $0x100] sm:$0xf]
    %v360 = vld [vmem:[%s2 + $0x104] sm:$0xf]
    %v361 = vld [vmem:[%s2 + $0x108] sm:$0xf]
    %v362 = vld [vmem:[%s2 + $0x10c] sm:$0xf]
    %v363 = vld [vmem:[%s2 + $0x110] sm:$0xf]
    %v364 = vld [vmem:[%s2 + $0x114] sm:$0xf]
    %v365 = vld [vmem:[%s2 + $0x118] sm:$0xf]
    %v366 = vld [vmem:[%s2 + $0x11c] sm:$0xf]
    %v367 = vld [vmem:[%s2 + $0x120] sm:$0xf]
    %v368 = vld [vmem:[%s2 + $0x124] sm:$0xf]
    %v369 = vld [vmem:[%s2 + $0x128] sm:$0xf]
    %v370 = vld [vmem:[%s2 + $0x12c] sm:$0xf]
    %v371 = vld [vmem:[%s2 + $0x130] sm:$0xf]
    %v372 = vld [vmem:[%s2 + $0x134] sm:$0xf]
    %v373 = vld [vmem:[%s2 + $0x138] sm:$0xf]
    %v374 = vld [vmem:[%s2 + $0x13c] sm:$0xf]
    %v375 = vld [vmem:[%s2 + $0x140] sm:$0xf]
    %v376 = vld [vmem:[%s2 + $0x144] sm:$0xf]
    %v377 = vld [vmem:[%s2 + $0x148] sm:$0xf]
    %v378 = vld [vmem:[%s2 + $0x14c] sm:$0xf]
    %v379 = vld [vmem:[%s2 + $0x150] sm:$0xf]
    %v380 = vld [vmem:[%s2 + $0x154] sm:$0xf]
    %v381 = vld [vmem:[%s2 + $0x158] sm:$0xf]
    %v382 = vld [vmem:[%s2 + $0x15c] sm:$0xf]
    %v383 = vld [vmem:[%s2 + $0x160] sm:$0xf]
    %v384 = vld [vmem:[%s2 + $0x164] sm:$0xf]
    %v385 = vld [vmem:[%s2 + $0x168] sm:$0xf]
    %v386 = vld [vmem:[%s2 + $0x16c] sm:$0xf]
    %v387 = vld [vmem:[%s2 + $0x170] sm:$0xf]
    %v388 = vld [vmem:[%s2 + $0x174] sm:$0xf]
    %v389 = vld [vmem:[%s2 + $0x178] sm:$0xf]
    %v390 = vld [vmem:[%s2 + $0x17c] sm:$0xf]
    %v391 = vld [vmem:[%s2 + $0x180] sm:$0xf]
    %v392 = vld [vmem:[%s2 + $0x184] sm:$0xf]
    %v393 = vld [vmem:[%s2 + $0x188] sm:$0xf]
    %v394 = vld [vmem:[%s2 + $0x18c] sm:$0xf]
    %v395 = vld [vmem:[%s2 + $0x190] sm:$0xf]
    %v396 = vld [vmem:[%s2 + $0x194] sm:$0xf]
    %v397 = vld [vmem:[%s2 + $0x198] sm:$0xf]
    %v398 = vld [vmem:[%s2 + $0x19c] sm:$0xf]
    %v399 = vld [vmem:[%s2 + $0x1a0] sm:$0xf]
    %v400 = vld [vmem:[%s2 + $0x1a4] sm:$0xf]
    %v401 = vld [vmem:[%s2 + $0x1a8] sm:$0xf]
    %v402 = vld [vmem:[%s2 + $0x1ac] sm:$0xf]
    %v403 = vld [vmem:[%s2 + $0x1b0] sm:$0xf]
    %v404 = vld [vmem:[%s2 + $0x1b4] sm:$0xf]
    %v405 = vld [vmem:[%s2 + $0x1b8] sm:$0xf]
    %v406 = vld [vmem:[%s2 + $0x1bc] sm:$0xf]
    %v407 = vld [vmem:[%s2 + $0x1c0] sm:$0xf]
    %v408 = vld [vmem:[%s2 + $0x1c4] sm:$0xf]
    %v409 = vld [vmem:[%s2 + $0x1c8] sm:$0xf]
    %v410 = vld [vmem:[%s2 + $0x1cc] sm:$0xf]
    %v411 = vld [vmem:[%s2 + $0x1d0] sm:$0xf]
    %v412 = vld [vmem:[%s2 + $0x1d4] sm:$0xf]
    %v413 = vld [vmem:[%s2 + $0x1d8] sm:$0xf]
    %v414 = vld [vmem:[%s2 + $0x1dc] sm:$0xf]
    %v415 = vld [vmem:[%s2 + $0x1e0] sm:$0xf]
    %v416 = vld [vmem:[%s2 + $0x1e4] sm:$0xf]
    %v417 = vld [vmem:[%s2 + $0x1e8] sm:$0xf]
    %v418 = vld [vmem:[%s2 + $0x1ec] sm:$0xf]
    %v419 = vld [vmem:[%s2 + $0x1f0] sm:$0xf]
    %v420 = vld [vmem:[%s2 + $0x1f4] sm:$0xf]
    %v421 = vld [vmem:[%s2 + $0x1f8] sm:$0xf]
    %v422 = vld [vmem:[%s2 + $0x1fc] sm:$0xf]
    %v423 = vld [vmem:[%s3 + $0xc8] sm:$0x1]
    %v424 = vperm.slane %v423, 0
    %v553 = vunpack.c.l.b16 %v295
    %v554 = vunpack.c.l.b16 %v296
    %v555 = vunpack.c.l.b16 %v297
    %v556 = vunpack.c.l.b16 %v298
    %v557 = vunpack.c.l.b16 %v299
    %v558 = vunpack.c.l.b16 %v300
    %v559 = vunpack.c.l.b16 %v301
    %v560 = vunpack.c.l.b16 %v302
    %v561 = vunpack.c.l.b16 %v303
    %v562 = vunpack.c.l.b16 %v304
    %v563 = vunpack.c.l.b16 %v305
    %v564 = vunpack.c.l.b16 %v306
    %v565 = vunpack.c.l.b16 %v307
    %v566 = vunpack.c.l.b16 %v308
    %v567 = vunpack.c.l.b16 %v309
    %v568 = vunpack.c.l.b16 %v310
    %v569 = vunpack.c.l.b16 %v311
    %v570 = vunpack.c.l.b16 %v312
    %v571 = vunpack.c.l.b16 %v313
    %v572 = vunpack.c.l.b16 %v314
    %v573 = vunpack.c.l.b16 %v315
    %v574 = vunpack.c.l.b16 %v316
    %v575 = vunpack.c.l.b16 %v317
    %v576 = vunpack.c.l.b16 %v318
    %v577 = vunpack.c.l.b16 %v319
    %v578 = vunpack.c.l.b16 %v320
    %v579 = vunpack.c.l.b16 %v321
    %v580 = vunpack.c.l.b16 %v322
    %v581 = vunpack.c.l.b16 %v323
    %v582 = vunpack.c.l.b16 %v324
    %v583 = vunpack.c.l.b16 %v325
    %v584 = vunpack.c.l.b16 %v326
    %v585 = vunpack.c.l.b16 %v327
    %v586 = vunpack.c.l.b16 %v328
    %v587 = vunpack.c.l.b16 %v329
    %v588 = vunpack.c.l.b16 %v330
    %v589 = vunpack.c.l.b16 %v331
    %v590 = vunpack.c.l.b16 %v332
    %v591 = vunpack.c.l.b16 %v333
    %v592 = vunpack.c.l.b16 %v334
    %v593 = vunpack.c.l.b16 %v335
    %v594 = vunpack.c.l.b16 %v336
    %v595 = vunpack.c.l.b16 %v337
    %v596 = vunpack.c.l.b16 %v338
    %v597 = vunpack.c.l.b16 %v339
    %v598 = vunpack.c.l.b16 %v340
    %v599 = vunpack.c.l.b16 %v341
    %v600 = vunpack.c.l.b16 %v342
    %v601 = vunpack.c.l.b16 %v343
    %v602 = vunpack.c.l.b16 %v344
    %v603 = vunpack.c.l.b16 %v345
    %v604 = vunpack.c.l.b16 %v346
    %v605 = vunpack.c.l.b16 %v347
    %v606 = vunpack.c.l.b16 %v348
    %v607 = vunpack.c.l.b16 %v349
    %v608 = vunpack.c.l.b16 %v350
    %v609 = vunpack.c.l.b16 %v351
    %v610 = vunpack.c.l.b16 %v352
    %v611 = vunpack.c.l.b16 %v353
    %v612 = vunpack.c.l.b16 %v354
    %v613 = vunpack.c.l.b16 %v355
    %v614 = vunpack.c.l.b16 %v356
    %v615 = vunpack.c.l.b16 %v357
    %v616 = vunpack.c.l.b16 %v358
    %v617 = vunpack.c.l.b16 %v359
    %v618 = vunpack.c.l.b16 %v360
    %v619 = vunpack.c.l.b16 %v361
    %v620 = vunpack.c.l.b16 %v362
    %v621 = vunpack.c.l.b16 %v363
    %v622 = vunpack.c.l.b16 %v364
    %v623 = vunpack.c.l.b16 %v365
    %v624 = vunpack.c.l.b16 %v366
    %v625 = vunpack.c.l.b16 %v367
    %v626 = vunpack.c.l.b16 %v368
    %v627 = vunpack.c.l.b16 %v369
    %v628 = vunpack.c.l.b16 %v370
    %v629 = vunpack.c.l.b16 %v371
    %v630 = vunpack.c.l.b16 %v372
    %v631 = vunpack.c.l.b16 %v373
    %v632 = vunpack.c.l.b16 %v374
    %v633 = vunpack.c.l.b16 %v375
    %v634 = vunpack.c.l.b16 %v376
    %v635 = vunpack.c.l.b16 %v377
    %v636 = vunpack.c.l.b16 %v378
    %v637 = vunpack.c.l.b16 %v379
    %v638 = vunpack.c.l.b16 %v380
    %v639 = vunpack.c.l.b16 %v381
    %v640 = vunpack.c.l.b16 %v382
    %v641 = vunpack.c.l.b16 %v383
    %v642 = vunpack.c.l.b16 %v384
    %v643 = vunpack.c.l.b16 %v385
    %v644 = vunpack.c.l.b16 %v386
    %v645 = vunpack.c.l.b16 %v387
    %v646 = vunpack.c.l.b16 %v388
    %v647 = vunpack.c.l.b16 %v389
    %v648 = vunpack.c.l.b16 %v390
    %v649 = vunpack.c.l.b16 %v391
    %v650 = vunpack.c.l.b16 %v392
    %v651 = vunpack.c.l.b16 %v393
    %v652 = vunpack.c.l.b16 %v394
    %v653 = vunpack.c.l.b16 %v395
    %v654 = vunpack.c.l.b16 %v396
    %v655 = vunpack.c.l.b16 %v397
    %v656 = vunpack.c.l.b16 %v398
    %v657 = vunpack.c.l.b16 %v399
    %v658 = vunpack.c.l.b16 %v400
    %v659 = vunpack.c.l.b16 %v401
    %v660 = vunpack.c.l.b16 %v402
    %v661 = vunpack.c.l.b16 %v403
    %v662 = vunpack.c.l.b16 %v404
    %v663 = vunpack.c.l.b16 %v405
    %v664 = vunpack.c.l.b16 %v406
    %v665 = vunpack.c.l.b16 %v407
    %v666 = vunpack.c.l.b16 %v408
    %v667 = vunpack.c.l.b16 %v409
    %v668 = vunpack.c.l.b16 %v410
    %v669 = vunpack.c.l.b16 %v411
    %v670 = vunpack.c.l.b16 %v412
    %v671 = vunpack.c.l.b16 %v413
    %v672 = vunpack.c.l.b16 %v414
    %v673 = vunpack.c.l.b16 %v415
    %v674 = vunpack.c.l.b16 %v416
    %v675 = vunpack.c.l.b16 %v417
    %v676 = vunpack.c.l.b16 %v418
    %v677 = vunpack.c.l.b16 %v419
    %v678 = vunpack.c.l.b16 %v420
    %v679 = vunpack.c.l.b16 %v421
    %v680 = vunpack.c.l.b16 %v422
    %v681 = vpack.c.b16 %v554, %v553
    %v682 = vpack.c.b16 %v556, %v555
    %v683 = vpack.c.b16 %v558, %v557
    %v684 = vpack.c.b16 %v560, %v559
    %v685 = vpack.c.b16 %v562, %v561
    %v686 = vpack.c.b16 %v564, %v563
    %v687 = vpack.c.b16 %v566, %v565
    %v688 = vpack.c.b16 %v568, %v567
    %v689 = vpack.c.b16 %v570, %v569
    %v690 = vpack.c.b16 %v572, %v571
    %v691 = vpack.c.b16 %v574, %v573
    %v692 = vpack.c.b16 %v576, %v575
    %v693 = vpack.c.b16 %v578, %v577
    %v694 = vpack.c.b16 %v580, %v579
    %v695 = vpack.c.b16 %v582, %v581
    %v696 = vpack.c.b16 %v584, %v583
    %v697 = vpack.c.b16 %v586, %v585
    %v698 = vpack.c.b16 %v588, %v587
    %v699 = vpack.c.b16 %v590, %v589
    %v700 = vpack.c.b16 %v592, %v591
    %v701 = vpack.c.b16 %v594, %v593
    %v702 = vpack.c.b16 %v596, %v595
    %v703 = vpack.c.b16 %v598, %v597
    %v704 = vpack.c.b16 %v600, %v599
    %v705 = vpack.c.b16 %v602, %v601
    %v706 = vpack.c.b16 %v604, %v603
    %v707 = vpack.c.b16 %v606, %v605
    %v708 = vpack.c.b16 %v608, %v607
    %v709 = vpack.c.b16 %v610, %v609
    %v710 = vpack.c.b16 %v612, %v611
    %v711 = vpack.c.b16 %v614, %v613
    %v712 = vpack.c.b16 %v616, %v615
    %v713 = vpack.c.b16 %v618, %v617
    %v714 = vpack.c.b16 %v620, %v619
    %v715 = vpack.c.b16 %v622, %v621
    %v716 = vpack.c.b16 %v624, %v623
    %v717 = vpack.c.b16 %v626, %v625
    %v718 = vpack.c.b16 %v628, %v627
    %v719 = vpack.c.b16 %v630, %v629
    %v720 = vpack.c.b16 %v632, %v631
    %v721 = vpack.c.b16 %v634, %v633
    %v722 = vpack.c.b16 %v636, %v635
    %v723 = vpack.c.b16 %v638, %v637
    %v724 = vpack.c.b16 %v640, %v639
    %v725 = vpack.c.b16 %v642, %v641
    %v726 = vpack.c.b16 %v644, %v643
    %v727 = vpack.c.b16 %v646, %v645
    %v728 = vpack.c.b16 %v648, %v647
    %v729 = vpack.c.b16 %v650, %v649
    %v730 = vpack.c.b16 %v652, %v651
    %v731 = vpack.c.b16 %v654, %v653
    %v732 = vpack.c.b16 %v656, %v655
    %v733 = vpack.c.b16 %v658, %v657
    %v734 = vpack.c.b16 %v660, %v659
    %v735 = vpack.c.b16 %v662, %v661
    %v736 = vpack.c.b16 %v664, %v663
    %v737 = vpack.c.b16 %v666, %v665
    %v738 = vpack.c.b16 %v668, %v667
    %v739 = vpack.c.b16 %v670, %v669
    %v740 = vpack.c.b16 %v672, %v671
    %v741 = vpack.c.b16 %v674, %v673
    %v742 = vpack.c.b16 %v676, %v675
    %v743 = vpack.c.b16 %v678, %v677
    %v744 = vpack.c.b16 %v680, %v679
    %809 = vmatpush.bf16.msra.mxu0 %v688
    %810 = vmatpush.bf16.msra.mxu0 %v687
    %811 = vmatpush.bf16.msra.mxu0 %v686
    %812 = vmatpush.bf16.msra.mxu0 %v685
    %813 = vmatpush.bf16.msra.mxu0 %v684
    %814 = vmatpush.bf16.msra.mxu0 %v683
    %815 = vmatpush.bf16.msra.mxu0 %v682
    %816 = vmatpush.bf16.msra.mxu0 %v681
    %817 = vmatmul.bf16.gmra.mxu0 %v287
    %v818 = vpop.f32.mrf.mxu0
    %v819 = vadd.f32 %v424, %v818
    %v820 = vpop.f32.mrf.mxu0
    %821 = vdwg.mxu0
    %822 = vmatpush.bf16.msra.mxu0 %v696
    %823 = vmatpush.bf16.msra.mxu0 %v695
    %824 = vmatpush.bf16.msra.mxu0 %v694
    %825 = vmatpush.bf16.msra.mxu0 %v693
    %826 = vmatpush.bf16.msra.mxu0 %v692
    %827 = vmatpush.bf16.msra.mxu0 %v691
    %828 = vmatpush.bf16.msra.mxu0 %v690
    %829 = vmatpush.bf16.msra.mxu0 %v689
    %830 = vmatmul.bf16.gmra.mxu0 %v288
    %v831 = vpop.f32.mrf.mxu0
    %v832 = vadd.f32 %v819, %v831
    %v833 = vpop.f32.mrf.mxu0
    %834 = vdwg.mxu0
    %835 = vmatpush.bf16.msra.mxu0 %v704
    %836 = vmatpush.bf16.msra.mxu0 %v703
    %837 = vmatpush.bf16.msra.mxu0 %v702
    %838 = vmatpush.bf16.msra.mxu0 %v701
    %839 = vmatpush.bf16.msra.mxu0 %v700
    %840 = vmatpush.bf16.msra.mxu0 %v699
    %841 = vmatpush.bf16.msra.mxu0 %v698
    %842 = vmatpush.bf16.msra.mxu0 %v697
    %843 = vmatmul.bf16.gmra.mxu0 %v289
    %v844 = vpop.f32.mrf.mxu0
    %v845 = vadd.f32 %v832, %v844
    %v846 = vpop.f32.mrf.mxu0
    %847 = vdwg.mxu0
    %848 = vmatpush.bf16.msra.mxu0 %v712
    %849 = vmatpush.bf16.msra.mxu0 %v711
    %850 = vmatpush.bf16.msra.mxu0 %v710
    %851 = vmatpush.bf16.msra.mxu0 %v709
    %852 = vmatpush.bf16.msra.mxu0 %v708
    %853 = vmatpush.bf16.msra.mxu0 %v707
    %854 = vmatpush.bf16.msra.mxu0 %v706
    %855 = vmatpush.bf16.msra.mxu0 %v705
    %856 = vmatmul.bf16.gmra.mxu0 %v290
    %v857 = vpop.f32.mrf.mxu0
    %v858 = vadd.f32 %v845, %v857
    %v859 = vpop.f32.mrf.mxu0
    %860 = vdwg.mxu0
    %861 = vmatpush.bf16.msra.mxu0 %v720
    %862 = vmatpush.bf16.msra.mxu0 %v719
    %863 = vmatpush.bf16.msra.mxu0 %v718
    %864 = vmatpush.bf16.msra.mxu0 %v717
    %865 = vmatpush.bf16.msra.mxu0 %v716
    %866 = vmatpush.bf16.msra.mxu0 %v715
    %867 = vmatpush.bf16.msra.mxu0 %v714
    %868 = vmatpush.bf16.msra.mxu0 %v713
    %869 = vmatmul.bf16.gmra.mxu0 %v291
    %v870 = vpop.f32.mrf.mxu0
    %v871 = vadd.f32 %v858, %v870
    %v872 = vpop.f32.mrf.mxu0
    %873 = vdwg.mxu0
    %874 = vmatpush.bf16.msra.mxu0 %v728
    %875 = vmatpush.bf16.msra.mxu0 %v727
    %876 = vmatpush.bf16.msra.mxu0 %v726
    %877 = vmatpush.bf16.msra.mxu0 %v725
    %878 = vmatpush.bf16.msra.mxu0 %v724
    %879 = vmatpush.bf16.msra.mxu0 %v723
    %880 = vmatpush.bf16.msra.mxu0 %v722
    %881 = vmatpush.bf16.msra.mxu0 %v721
    %882 = vmatmul.bf16.gmra.mxu0 %v292
    %v883 = vpop.f32.mrf.mxu0
    %v884 = vadd.f32 %v871, %v883
    %v885 = vpop.f32.mrf.mxu0
    %886 = vdwg.mxu0
    %887 = vmatpush.bf16.msra.mxu0 %v736
    %888 = vmatpush.bf16.msra.mxu0 %v735
    %889 = vmatpush.bf16.msra.mxu0 %v734
    %890 = vmatpush.bf16.msra.mxu0 %v733
    %891 = vmatpush.bf16.msra.mxu0 %v732
    %892 = vmatpush.bf16.msra.mxu0 %v731
    %893 = vmatpush.bf16.msra.mxu0 %v730
    %894 = vmatpush.bf16.msra.mxu0 %v729
    %895 = vmatmul.bf16.gmra.mxu0 %v293
    %v896 = vpop.f32.mrf.mxu0
    %v897 = vadd.f32 %v884, %v896
    %v898 = vpop.f32.mrf.mxu0
    %899 = vdwg.mxu0
    %900 = vmatpush.bf16.msra.mxu0 %v744
    %901 = vmatpush.bf16.msra.mxu0 %v743
    %902 = vmatpush.bf16.msra.mxu0 %v742
    %903 = vmatpush.bf16.msra.mxu0 %v741
    %904 = vmatpush.bf16.msra.mxu0 %v740
    %905 = vmatpush.bf16.msra.mxu0 %v739
    %906 = vmatpush.bf16.msra.mxu0 %v738
    %907 = vmatpush.bf16.msra.mxu0 %v737
    %908 = vmatmul.bf16.gmra.mxu0 %v294
    %v909 = vpop.f32.mrf.mxu0
    %v910 = vadd.f32 %v897, %v909
    %v911 = vpop.f32.mrf.mxu0
    %912 = vdwg.mxu0
    %v913 = vxor.u32 %v910, 2147483648
    %v914 = vmul.f32 %v913, 1.442695
    %v915 = vpow.pop %v914
    %v916 = vadd.f32 %v915, 1.0
    %v917 = vrcp.pop %v916
    %v918 = vmul.f32 %v916, %v917
    %v919 = vsub.f32 1.0, %v918
    %v920 = vmul.f32 %v917, %v919
    %v921 = vadd.f32 %v917, %v920
    %vm922 = vweird.f32 %v916
    %vm923 = vweird.f32 %v917
    %vm924 = vmor %vm922, %vm923
    %v925 = vsel %vm924, %v917, %v921
    %v926 = vand.u32 2147483647, %v916
    %vm927 = vcmp.eq.f32.partialorder %v926, 8.507059e+37
    %v928 = vand.u32 %v916, 2147483648
    %v929 = vor.u32 1.1754944e-38, %v928
    %v930 = vsel %vm927, %v929, %v925
    %v931 = vmul.f32 1.0, %v930
    %v932 = vmul.f32 %v931, %v76
    %v933 = vld [vmem:[%s3 + $0x40] sm:$0xff]
    %v934 = vld [vmem:[%s3 + $0x48] sm:$0xff]
    %v935 = vld [vmem:[%s3 + $0x50] sm:$0xff]
    %v936 = vld [vmem:[%s3 + $0x58] sm:$0xff]
    %v937 = vld [vmem:[%s3 + $0x60] sm:$0xff]
    %v938 = vld [vmem:[%s3 + $0x68] sm:$0xff]
    %v939 = vld [vmem:[%s3 + $0x70] sm:$0xff]
    %v940 = vld [vmem:[%s3 + $0x78] sm:$0xff]
    %v941 = vld [vmem:[%s3 + $0xd0] sm:$0x1]
    %v942 = vperm.slane %v941, 0
    %v944 = vsel %vm52, %v932, 0
    %946 = vmatpush.msra.mxu0 0.0
    %947 = vmatpush.msra.mxu0 0.0
    %948 = vmatpush.msra.mxu0 0.0
    %949 = vmatpush.msra.mxu0 0.0
    %950 = vmatpush.msra.mxu0 0.0
    %951 = vmatpush.msra.mxu0 0.0
    %952 = vmatpush.msra.mxu0 0.0
    %953 = vmatpush.msra.mxu0 0.0
    %954 = vmatpush.msra.mxu0 %v940
    %955 = vmatpush.msra.mxu0 %v939
    %956 = vmatpush.msra.mxu0 %v938
    %957 = vmatpush.msra.mxu0 %v937
    %958 = vmatpush.msra.mxu0 %v936
    %959 = vmatpush.msra.mxu0 %v935
    %960 = vmatpush.msra.mxu0 %v934
    %961 = vmatpush.msra.mxu0 %v933
    %962 = vmatmul.f32.gmra.mxu0 %v944
    %v963 = vpop.f32.mrf.mxu0
    %v964 = vadd.f32 %v942, %v963
    %965 = vdwg.mxu0
    %v966 = vmax.f32 %v964, 0.0
    %v967 = vpack.c.bf16 %v966, %v966
    %v969 = vsel %vm158, %v967, 0
    %971 = vmatpush.bf16.msra.mxu0 0
    %972 = vmatpush.bf16.msra.mxu0 0
    %973 = vmatpush.bf16.msra.mxu0 0
    %974 = vmatpush.bf16.msra.mxu0 0
    %975 = vmatpush.bf16.msra.mxu0 0
    %976 = vmatpush.bf16.msra.mxu0 0
    %977 = vmatpush.bf16.msra.mxu0 %v134
    %978 = vmatpush.bf16.msra.mxu0 %v126
    %979 = vmatmul.bf16.gmra.mxu0 %v969
    %v980 = vpop.f32.mrf.mxu0
    %v981 = vadd.f32 0.0, %v980
    %v982 = vpop.f32.mrf.mxu0
    %983 = vdwg.mxu0
    %984 = vmatpush.bf16.msra.mxu0 0
    %985 = vmatpush.bf16.msra.mxu0 0
    %986 = vmatpush.bf16.msra.mxu0 0
    %987 = vmatpush.bf16.msra.mxu0 0
    %988 = vmatpush.bf16.msra.mxu0 0
    %989 = vmatpush.bf16.msra.mxu0 0
    %990 = vmatpush.bf16.msra.mxu0 %v135
    %991 = vmatpush.bf16.msra.mxu0 %v127
    %992 = vmatmul.bf16.gmra.mxu0 %v969
    %v993 = vpop.f32.mrf.mxu0
    %v994 = vadd.f32 0.0, %v993
    %v995 = vpop.f32.mrf.mxu0
    %996 = vdwg.mxu0
    %997 = vmatpush.bf16.msra.mxu0 0
    %998 = vmatpush.bf16.msra.mxu0 0
    %999 = vmatpush.bf16.msra.mxu0 0
    %1000 = vmatpush.bf16.msra.mxu0 0
    %1001 = vmatpush.bf16.msra.mxu0 0
    %1002 = vmatpush.bf16.msra.mxu0 0
    %1003 = vmatpush.bf16.msra.mxu0 %v136
    %1004 = vmatpush.bf16.msra.mxu0 %v128
    %1005 = vmatmul.bf16.gmra.mxu0 %v969
    %v1006 = vpop.f32.mrf.mxu0
    %v1007 = vadd.f32 0.0, %v1006
    %v1008 = vpop.f32.mrf.mxu0
    %1009 = vdwg.mxu0
    %1010 = vmatpush.bf16.msra.mxu0 0
    %1011 = vmatpush.bf16.msra.mxu0 0
    %1012 = vmatpush.bf16.msra.mxu0 0
    %1013 = vmatpush.bf16.msra.mxu0 0
    %1014 = vmatpush.bf16.msra.mxu0 0
    %1015 = vmatpush.bf16.msra.mxu0 0
    %1016 = vmatpush.bf16.msra.mxu0 %v137
    %1017 = vmatpush.bf16.msra.mxu0 %v129
    %1018 = vmatmul.bf16.gmra.mxu0 %v969
    %v1019 = vpop.f32.mrf.mxu0
    %v1020 = vadd.f32 0.0, %v1019
    %v1021 = vpop.f32.mrf.mxu0
    %1022 = vdwg.mxu0
    %1023 = vmatpush.bf16.msra.mxu0 0
    %1024 = vmatpush.bf16.msra.mxu0 0
    %1025 = vmatpush.bf16.msra.mxu0 0
    %1026 = vmatpush.bf16.msra.mxu0 0
    %1027 = vmatpush.bf16.msra.mxu0 0
    %1028 = vmatpush.bf16.msra.mxu0 0
    %1029 = vmatpush.bf16.msra.mxu0 %v138
    %1030 = vmatpush.bf16.msra.mxu0 %v130
    %1031 = vmatmul.bf16.gmra.mxu0 %v969
    %v1032 = vpop.f32.mrf.mxu0
    %v1033 = vadd.f32 0.0, %v1032
    %v1034 = vpop.f32.mrf.mxu0
    %1035 = vdwg.mxu0
    %1036 = vmatpush.bf16.msra.mxu0 0
    %1037 = vmatpush.bf16.msra.mxu0 0
    %1038 = vmatpush.bf16.msra.mxu0 0
    %1039 = vmatpush.bf16.msra.mxu0 0
    %1040 = vmatpush.bf16.msra.mxu0 0
    %1041 = vmatpush.bf16.msra.mxu0 0
    %1042 = vmatpush.bf16.msra.mxu0 %v139
    %1043 = vmatpush.bf16.msra.mxu0 %v131
    %1044 = vmatmul.bf16.gmra.mxu0 %v969
    %v1045 = vpop.f32.mrf.mxu0
    %v1046 = vadd.f32 0.0, %v1045
    %v1047 = vpop.f32.mrf.mxu0
    %1048 = vdwg.mxu0
    %1049 = vmatpush.bf16.msra.mxu0 0
    %1050 = vmatpush.bf16.msra.mxu0 0
    %1051 = vmatpush.bf16.msra.mxu0 0
    %1052 = vmatpush.bf16.msra.mxu0 0
    %1053 = vmatpush.bf16.msra.mxu0 0
    %1054 = vmatpush.bf16.msra.mxu0 0
    %1055 = vmatpush.bf16.msra.mxu0 %v140
    %1056 = vmatpush.bf16.msra.mxu0 %v132
    %1057 = vmatmul.bf16.gmra.mxu0 %v969
    %v1058 = vpop.f32.mrf.mxu0
    %v1059 = vadd.f32 0.0, %v1058
    %v1060 = vpop.f32.mrf.mxu0
    %1061 = vdwg.mxu0
    %1062 = vmatpush.bf16.msra.mxu0 0
    %1063 = vmatpush.bf16.msra.mxu0 0
    %1064 = vmatpush.bf16.msra.mxu0 0
    %1065 = vmatpush.bf16.msra.mxu0 0
    %1066 = vmatpush.bf16.msra.mxu0 0
    %1067 = vmatpush.bf16.msra.mxu0 0
    %1068 = vmatpush.bf16.msra.mxu0 %v141
    %1069 = vmatpush.bf16.msra.mxu0 %v133
    %1070 = vmatmul.bf16.gmra.mxu0 %v969
    %v1071 = vpop.f32.mrf.mxu0
    %v1072 = vadd.f32 0.0, %v1071
    %v1073 = vpop.f32.mrf.mxu0
    %1074 = vdwg.mxu0
    %1076 = vrot.lane.b32.xlu0 %v966, 96
    %v1077 = vpop.permute.xlu0 %1076
    %1079 = vrot.lane.b32.xlu0 %v966, 32
    %v1080 = vpop.permute.xlu0 %1079
    %1082 = vrot.lane.b32.xlu0 %v966, 64
    %v1083 = vpop.permute.xlu0 %1082
    %v1085 = vsel %vm158, %v1077, %v966
    %v1086 = vsel %vm52, %v1085, %v1080
    %v1087 = vsel %vm277, %v1086, %v1083
    %v1088 = vmul.f32 %v981, %v1087
    %v1089 = vmul.f32 %v994, %v1087
    %v1090 = vmul.f32 %v1007, %v1087
    %v1091 = vmul.f32 %v1020, %v1087
    %v1092 = vmul.f32 %v1033, %v1087
    %v1093 = vmul.f32 %v1046, %v1087
    %v1094 = vmul.f32 %v1059, %v1087
    %v1095 = vmul.f32 %v1072, %v1087
    %v1096 = vpack.c.bf16 %v1088, %v1088
    %v1097 = vpack.c.bf16 %v1089, %v1089
    %v1098 = vpack.c.bf16 %v1090, %v1090
    %v1099 = vpack.c.bf16 %v1091, %v1091
    %v1100 = vpack.c.bf16 %v1092, %v1092
    %v1101 = vpack.c.bf16 %v1093, %v1093
    %v1102 = vpack.c.bf16 %v1094, %v1094
    %v1103 = vpack.c.bf16 %v1095, %v1095
    %v1104 = vld [vmem:[%s2 + $0x200] sm:$0xf]
    %v1105 = vld [vmem:[%s2 + $0x204] sm:$0xf]
    %v1106 = vld [vmem:[%s2 + $0x208] sm:$0xf]
    %v1107 = vld [vmem:[%s2 + $0x20c] sm:$0xf]
    %v1108 = vld [vmem:[%s2 + $0x210] sm:$0xf]
    %v1109 = vld [vmem:[%s2 + $0x214] sm:$0xf]
    %v1110 = vld [vmem:[%s2 + $0x218] sm:$0xf]
    %v1111 = vld [vmem:[%s2 + $0x21c] sm:$0xf]
    %v1112 = vld [vmem:[%s2 + $0x220] sm:$0xf]
    %v1113 = vld [vmem:[%s2 + $0x224] sm:$0xf]
    %v1114 = vld [vmem:[%s2 + $0x228] sm:$0xf]
    %v1115 = vld [vmem:[%s2 + $0x22c] sm:$0xf]
    %v1116 = vld [vmem:[%s2 + $0x230] sm:$0xf]
    %v1117 = vld [vmem:[%s2 + $0x234] sm:$0xf]
    %v1118 = vld [vmem:[%s2 + $0x238] sm:$0xf]
    %v1119 = vld [vmem:[%s2 + $0x23c] sm:$0xf]
    %v1120 = vld [vmem:[%s2 + $0x240] sm:$0xf]
    %v1121 = vld [vmem:[%s2 + $0x244] sm:$0xf]
    %v1122 = vld [vmem:[%s2 + $0x248] sm:$0xf]
    %v1123 = vld [vmem:[%s2 + $0x24c] sm:$0xf]
    %v1124 = vld [vmem:[%s2 + $0x250] sm:$0xf]
    %v1125 = vld [vmem:[%s2 + $0x254] sm:$0xf]
    %v1126 = vld [vmem:[%s2 + $0x258] sm:$0xf]
    %v1127 = vld [vmem:[%s2 + $0x25c] sm:$0xf]
    %v1128 = vld [vmem:[%s2 + $0x260] sm:$0xf]
    %v1129 = vld [vmem:[%s2 + $0x264] sm:$0xf]
    %v1130 = vld [vmem:[%s2 + $0x268] sm:$0xf]
    %v1131 = vld [vmem:[%s2 + $0x26c] sm:$0xf]
    %v1132 = vld [vmem:[%s2 + $0x270] sm:$0xf]
    %v1133 = vld [vmem:[%s2 + $0x274] sm:$0xf]
    %v1134 = vld [vmem:[%s2 + $0x278] sm:$0xf]
    %v1135 = vld [vmem:[%s2 + $0x27c] sm:$0xf]
    %v1136 = vld [vmem:[%s2 + $0x280] sm:$0xf]
    %v1137 = vld [vmem:[%s2 + $0x284] sm:$0xf]
    %v1138 = vld [vmem:[%s2 + $0x288] sm:$0xf]
    %v1139 = vld [vmem:[%s2 + $0x28c] sm:$0xf]
    %v1140 = vld [vmem:[%s2 + $0x290] sm:$0xf]
    %v1141 = vld [vmem:[%s2 + $0x294] sm:$0xf]
    %v1142 = vld [vmem:[%s2 + $0x298] sm:$0xf]
    %v1143 = vld [vmem:[%s2 + $0x29c] sm:$0xf]
    %v1144 = vld [vmem:[%s2 + $0x2a0] sm:$0xf]
    %v1145 = vld [vmem:[%s2 + $0x2a4] sm:$0xf]
    %v1146 = vld [vmem:[%s2 + $0x2a8] sm:$0xf]
    %v1147 = vld [vmem:[%s2 + $0x2ac] sm:$0xf]
    %v1148 = vld [vmem:[%s2 + $0x2b0] sm:$0xf]
    %v1149 = vld [vmem:[%s2 + $0x2b4] sm:$0xf]
    %v1150 = vld [vmem:[%s2 + $0x2b8] sm:$0xf]
    %v1151 = vld [vmem:[%s2 + $0x2bc] sm:$0xf]
    %v1152 = vld [vmem:[%s2 + $0x2c0] sm:$0xf]
    %v1153 = vld [vmem:[%s2 + $0x2c4] sm:$0xf]
    %v1154 = vld [vmem:[%s2 + $0x2c8] sm:$0xf]
    %v1155 = vld [vmem:[%s2 + $0x2cc] sm:$0xf]
    %v1156 = vld [vmem:[%s2 + $0x2d0] sm:$0xf]
    %v1157 = vld [vmem:[%s2 + $0x2d4] sm:$0xf]
    %v1158 = vld [vmem:[%s2 + $0x2d8] sm:$0xf]
    %v1159 = vld [vmem:[%s2 + $0x2dc] sm:$0xf]
    %v1160 = vld [vmem:[%s2 + $0x2e0] sm:$0xf]
    %v1161 = vld [vmem:[%s2 + $0x2e4] sm:$0xf]
    %v1162 = vld [vmem:[%s2 + $0x2e8] sm:$0xf]
    %v1163 = vld [vmem:[%s2 + $0x2ec] sm:$0xf]
    %v1164 = vld [vmem:[%s2 + $0x2f0] sm:$0xf]
    %v1165 = vld [vmem:[%s2 + $0x2f4] sm:$0xf]
    %v1166 = vld [vmem:[%s2 + $0x2f8] sm:$0xf]
    %v1167 = vld [vmem:[%s2 + $0x2fc] sm:$0xf]
    %v1168 = vld [vmem:[%s2 + $0x300] sm:$0xf]
    %v1169 = vld [vmem:[%s2 + $0x304] sm:$0xf]
    %v1170 = vld [vmem:[%s2 + $0x308] sm:$0xf]
    %v1171 = vld [vmem:[%s2 + $0x30c] sm:$0xf]
    %v1172 = vld [vmem:[%s2 + $0x310] sm:$0xf]
    %v1173 = vld [vmem:[%s2 + $0x314] sm:$0xf]
    %v1174 = vld [vmem:[%s2 + $0x318] sm:$0xf]
    %v1175 = vld [vmem:[%s2 + $0x31c] sm:$0xf]
    %v1176 = vld [vmem:[%s2 + $0x320] sm:$0xf]
    %v1177 = vld [vmem:[%s2 + $0x324] sm:$0xf]
    %v1178 = vld [vmem:[%s2 + $0x328] sm:$0xf]
    %v1179 = vld [vmem:[%s2 + $0x32c] sm:$0xf]
    %v1180 = vld [vmem:[%s2 + $0x330] sm:$0xf]
    %v1181 = vld [vmem:[%s2 + $0x334] sm:$0xf]
    %v1182 = vld [vmem:[%s2 + $0x338] sm:$0xf]
    %v1183 = vld [vmem:[%s2 + $0x33c] sm:$0xf]
    %v1184 = vld [vmem:[%s2 + $0x340] sm:$0xf]
    %v1185 = vld [vmem:[%s2 + $0x344] sm:$0xf]
    %v1186 = vld [vmem:[%s2 + $0x348] sm:$0xf]
    %v1187 = vld [vmem:[%s2 + $0x34c] sm:$0xf]
    %v1188 = vld [vmem:[%s2 + $0x350] sm:$0xf]
    %v1189 = vld [vmem:[%s2 + $0x354] sm:$0xf]
    %v1190 = vld [vmem:[%s2 + $0x358] sm:$0xf]
    %v1191 = vld [vmem:[%s2 + $0x35c] sm:$0xf]
    %v1192 = vld [vmem:[%s2 + $0x360] sm:$0xf]
    %v1193 = vld [vmem:[%s2 + $0x364] sm:$0xf]
    %v1194 = vld [vmem:[%s2 + $0x368] sm:$0xf]
    %v1195 = vld [vmem:[%s2 + $0x36c] sm:$0xf]
    %v1196 = vld [vmem:[%s2 + $0x370] sm:$0xf]
    %v1197 = vld [vmem:[%s2 + $0x374] sm:$0xf]
    %v1198 = vld [vmem:[%s2 + $0x378] sm:$0xf]
    %v1199 = vld [vmem:[%s2 + $0x37c] sm:$0xf]
    %v1200 = vld [vmem:[%s2 + $0x380] sm:$0xf]
    %v1201 = vld [vmem:[%s2 + $0x384] sm:$0xf]
    %v1202 = vld [vmem:[%s2 + $0x388] sm:$0xf]
    %v1203 = vld [vmem:[%s2 + $0x38c] sm:$0xf]
    %v1204 = vld [vmem:[%s2 + $0x390] sm:$0xf]
    %v1205 = vld [vmem:[%s2 + $0x394] sm:$0xf]
    %v1206 = vld [vmem:[%s2 + $0x398] sm:$0xf]
    %v1207 = vld [vmem:[%s2 + $0x39c] sm:$0xf]
    %v1208 = vld [vmem:[%s2 + $0x3a0] sm:$0xf]
    %v1209 = vld [vmem:[%s2 + $0x3a4] sm:$0xf]
    %v1210 = vld [vmem:[%s2 + $0x3a8] sm:$0xf]
    %v1211 = vld [vmem:[%s2 + $0x3ac] sm:$0xf]
    %v1212 = vld [vmem:[%s2 + $0x3b0] sm:$0xf]
    %v1213 = vld [vmem:[%s2 + $0x3b4] sm:$0xf]
    %v1214 = vld [vmem:[%s2 + $0x3b8] sm:$0xf]
    %v1215 = vld [vmem:[%s2 + $0x3bc] sm:$0xf]
    %v1216 = vld [vmem:[%s2 + $0x3c0] sm:$0xf]
    %v1217 = vld [vmem:[%s2 + $0x3c4] sm:$0xf]
    %v1218 = vld [vmem:[%s2 + $0x3c8] sm:$0xf]
    %v1219 = vld [vmem:[%s2 + $0x3cc] sm:$0xf]
    %v1220 = vld [vmem:[%s2 + $0x3d0] sm:$0xf]
    %v1221 = vld [vmem:[%s2 + $0x3d4] sm:$0xf]
    %v1222 = vld [vmem:[%s2 + $0x3d8] sm:$0xf]
    %v1223 = vld [vmem:[%s2 + $0x3dc] sm:$0xf]
    %v1224 = vld [vmem:[%s2 + $0x3e0] sm:$0xf]
    %v1225 = vld [vmem:[%s2 + $0x3e4] sm:$0xf]
    %v1226 = vld [vmem:[%s2 + $0x3e8] sm:$0xf]
    %v1227 = vld [vmem:[%s2 + $0x3ec] sm:$0xf]
    %v1228 = vld [vmem:[%s2 + $0x3f0] sm:$0xf]
    %v1229 = vld [vmem:[%s2 + $0x3f4] sm:$0xf]
    %v1230 = vld [vmem:[%s2 + $0x3f8] sm:$0xf]
    %v1231 = vld [vmem:[%s2 + $0x3fc] sm:$0xf]
    %v1232 = vld [vmem:[%s3 + $0x80] sm:$0xff]
    %v1233 = vld [vmem:[%s3 + $0x88] sm:$0xff]
    %v1234 = vld [vmem:[%s3 + $0x90] sm:$0xff]
    %v1235 = vld [vmem:[%s3 + $0x98] sm:$0xff]
    %v1236 = vld [vmem:[%s3 + $0xa0] sm:$0xff]
    %v1237 = vld [vmem:[%s3 + $0xa8] sm:$0xff]
    %v1238 = vld [vmem:[%s3 + $0xb0] sm:$0xff]
    %v1239 = vld [vmem:[%s3 + $0xb8] sm:$0xff]
    %v1240 = vsel %vm52, %v966, 0
    %1242 = vmatpush.msra.mxu0 0.0
    %1243 = vmatpush.msra.mxu0 0.0
    %1244 = vmatpush.msra.mxu0 0.0
    %1245 = vmatpush.msra.mxu0 0.0
    %1246 = vmatpush.msra.mxu0 0.0
    %1247 = vmatpush.msra.mxu0 0.0
    %1248 = vmatpush.msra.mxu0 0.0
    %1249 = vmatpush.msra.mxu0 0.0
    %1250 = vmatpush.msra.mxu0 %v1239
    %1251 = vmatpush.msra.mxu0 %v1238
    %1252 = vmatpush.msra.mxu0 %v1237
    %1253 = vmatpush.msra.mxu0 %v1236
    %1254 = vmatpush.msra.mxu0 %v1235
    %1255 = vmatpush.msra.mxu0 %v1234
    %1256 = vmatpush.msra.mxu0 %v1233
    %1257 = vmatpush.msra.mxu0 %v1232
    %1258 = vmatmul.f32.gmra.mxu0 %v1240
    %v1259 = vpop.f32.mrf.mxu0
    %v1260 = vadd.f32 0.0, %v1259
    %1261 = vdwg.mxu0
    %v1390 = vunpack.c.l.b16 %v1104
    %v1391 = vunpack.c.l.b16 %v1105
    %v1392 = vunpack.c.l.b16 %v1106
    %v1393 = vunpack.c.l.b16 %v1107
    %v1394 = vunpack.c.l.b16 %v1108
    %v1395 = vunpack.c.l.b16 %v1109
    %v1396 = vunpack.c.l.b16 %v1110
    %v1397 = vunpack.c.l.b16 %v1111
    %v1398 = vunpack.c.l.b16 %v1112
    %v1399 = vunpack.c.l.b16 %v1113
    %v1400 = vunpack.c.l.b16 %v1114
    %v1401 = vunpack.c.l.b16 %v1115
    %v1402 = vunpack.c.l.b16 %v1116
    %v1403 = vunpack.c.l.b16 %v1117
    %v1404 = vunpack.c.l.b16 %v1118
    %v1405 = vunpack.c.l.b16 %v1119
    %v1406 = vunpack.c.l.b16 %v1120
    %v1407 = vunpack.c.l.b16 %v1121
    %v1408 = vunpack.c.l.b16 %v1122
    %v1409 = vunpack.c.l.b16 %v1123
    %v1410 = vunpack.c.l.b16 %v1124
    %v1411 = vunpack.c.l.b16 %v1125
    %v1412 = vunpack.c.l.b16 %v1126
    %v1413 = vunpack.c.l.b16 %v1127
    %v1414 = vunpack.c.l.b16 %v1128
    %v1415 = vunpack.c.l.b16 %v1129
    %v1416 = vunpack.c.l.b16 %v1130
    %v1417 = vunpack.c.l.b16 %v1131
    %v1418 = vunpack.c.l.b16 %v1132
    %v1419 = vunpack.c.l.b16 %v1133
    %v1420 = vunpack.c.l.b16 %v1134
    %v1421 = vunpack.c.l.b16 %v1135
    %v1422 = vunpack.c.l.b16 %v1136
    %v1423 = vunpack.c.l.b16 %v1137
    %v1424 = vunpack.c.l.b16 %v1138
    %v1425 = vunpack.c.l.b16 %v1139
    %v1426 = vunpack.c.l.b16 %v1140
    %v1427 = vunpack.c.l.b16 %v1141
    %v1428 = vunpack.c.l.b16 %v1142
    %v1429 = vunpack.c.l.b16 %v1143
    %v1430 = vunpack.c.l.b16 %v1144
    %v1431 = vunpack.c.l.b16 %v1145
    %v1432 = vunpack.c.l.b16 %v1146
    %v1433 = vunpack.c.l.b16 %v1147
    %v1434 = vunpack.c.l.b16 %v1148
    %v1435 = vunpack.c.l.b16 %v1149
    %v1436 = vunpack.c.l.b16 %v1150
    %v1437 = vunpack.c.l.b16 %v1151
    %v1438 = vunpack.c.l.b16 %v1152
    %v1439 = vunpack.c.l.b16 %v1153
    %v1440 = vunpack.c.l.b16 %v1154
    %v1441 = vunpack.c.l.b16 %v1155
    %v1442 = vunpack.c.l.b16 %v1156
    %v1443 = vunpack.c.l.b16 %v1157
    %v1444 = vunpack.c.l.b16 %v1158
    %v1445 = vunpack.c.l.b16 %v1159
    %v1446 = vunpack.c.l.b16 %v1160
    %v1447 = vunpack.c.l.b16 %v1161
    %v1448 = vunpack.c.l.b16 %v1162
    %v1449 = vunpack.c.l.b16 %v1163
    %v1450 = vunpack.c.l.b16 %v1164
    %v1451 = vunpack.c.l.b16 %v1165
    %v1452 = vunpack.c.l.b16 %v1166
    %v1453 = vunpack.c.l.b16 %v1167
    %v1454 = vunpack.c.l.b16 %v1168
    %v1455 = vunpack.c.l.b16 %v1169
    %v1456 = vunpack.c.l.b16 %v1170
    %v1457 = vunpack.c.l.b16 %v1171
    %v1458 = vunpack.c.l.b16 %v1172
    %v1459 = vunpack.c.l.b16 %v1173
    %v1460 = vunpack.c.l.b16 %v1174
    %v1461 = vunpack.c.l.b16 %v1175
    %v1462 = vunpack.c.l.b16 %v1176
    %v1463 = vunpack.c.l.b16 %v1177
    %v1464 = vunpack.c.l.b16 %v1178
    %v1465 = vunpack.c.l.b16 %v1179
    %v1466 = vunpack.c.l.b16 %v1180
    %v1467 = vunpack.c.l.b16 %v1181
    %v1468 = vunpack.c.l.b16 %v1182
    %v1469 = vunpack.c.l.b16 %v1183
    %v1470 = vunpack.c.l.b16 %v1184
    %v1471 = vunpack.c.l.b16 %v1185
    %v1472 = vunpack.c.l.b16 %v1186
    %v1473 = vunpack.c.l.b16 %v1187
    %v1474 = vunpack.c.l.b16 %v1188
    %v1475 = vunpack.c.l.b16 %v1189
    %v1476 = vunpack.c.l.b16 %v1190
    %v1477 = vunpack.c.l.b16 %v1191
    %v1478 = vunpack.c.l.b16 %v1192
    %v1479 = vunpack.c.l.b16 %v1193
    %v1480 = vunpack.c.l.b16 %v1194
    %v1481 = vunpack.c.l.b16 %v1195
    %v1482 = vunpack.c.l.b16 %v1196
    %v1483 = vunpack.c.l.b16 %v1197
    %v1484 = vunpack.c.l.b16 %v1198
    %v1485 = vunpack.c.l.b16 %v1199
    %v1486 = vunpack.c.l.b16 %v1200
    %v1487 = vunpack.c.l.b16 %v1201
    %v1488 = vunpack.c.l.b16 %v1202
    %v1489 = vunpack.c.l.b16 %v1203
    %v1490 = vunpack.c.l.b16 %v1204
    %v1491 = vunpack.c.l.b16 %v1205
    %v1492 = vunpack.c.l.b16 %v1206
    %v1493 = vunpack.c.l.b16 %v1207
    %v1494 = vunpack.c.l.b16 %v1208
    %v1495 = vunpack.c.l.b16 %v1209
    %v1496 = vunpack.c.l.b16 %v1210
    %v1497 = vunpack.c.l.b16 %v1211
    %v1498 = vunpack.c.l.b16 %v1212
    %v1499 = vunpack.c.l.b16 %v1213
    %v1500 = vunpack.c.l.b16 %v1214
    %v1501 = vunpack.c.l.b16 %v1215
    %v1502 = vunpack.c.l.b16 %v1216
    %v1503 = vunpack.c.l.b16 %v1217
    %v1504 = vunpack.c.l.b16 %v1218
    %v1505 = vunpack.c.l.b16 %v1219
    %v1506 = vunpack.c.l.b16 %v1220
    %v1507 = vunpack.c.l.b16 %v1221
    %v1508 = vunpack.c.l.b16 %v1222
    %v1509 = vunpack.c.l.b16 %v1223
    %v1510 = vunpack.c.l.b16 %v1224
    %v1511 = vunpack.c.l.b16 %v1225
    %v1512 = vunpack.c.l.b16 %v1226
    %v1513 = vunpack.c.l.b16 %v1227
    %v1514 = vunpack.c.l.b16 %v1228
    %v1515 = vunpack.c.l.b16 %v1229
    %v1516 = vunpack.c.l.b16 %v1230
    %v1517 = vunpack.c.l.b16 %v1231
    %v1518 = vpack.c.b16 %v1391, %v1390
    %v1519 = vpack.c.b16 %v1393, %v1392
    %v1520 = vpack.c.b16 %v1395, %v1394
    %v1521 = vpack.c.b16 %v1397, %v1396
    %v1522 = vpack.c.b16 %v1399, %v1398
    %v1523 = vpack.c.b16 %v1401, %v1400
    %v1524 = vpack.c.b16 %v1403, %v1402
    %v1525 = vpack.c.b16 %v1405, %v1404
    %v1526 = vpack.c.b16 %v1407, %v1406
    %v1527 = vpack.c.b16 %v1409, %v1408
    %v1528 = vpack.c.b16 %v1411, %v1410
    %v1529 = vpack.c.b16 %v1413, %v1412
    %v1530 = vpack.c.b16 %v1415, %v1414
    %v1531 = vpack.c.b16 %v1417, %v1416
    %v1532 = vpack.c.b16 %v1419, %v1418
    %v1533 = vpack.c.b16 %v1421, %v1420
    %v1534 = vpack.c.b16 %v1423, %v1422
    %v1535 = vpack.c.b16 %v1425, %v1424
    %v1536 = vpack.c.b16 %v1427, %v1426
    %v1537 = vpack.c.b16 %v1429, %v1428
    %v1538 = vpack.c.b16 %v1431, %v1430
    %v1539 = vpack.c.b16 %v1433, %v1432
    %v1540 = vpack.c.b16 %v1435, %v1434
    %v1541 = vpack.c.b16 %v1437, %v1436
    %v1542 = vpack.c.b16 %v1439, %v1438
    %v1543 = vpack.c.b16 %v1441, %v1440
    %v1544 = vpack.c.b16 %v1443, %v1442
    %v1545 = vpack.c.b16 %v1445, %v1444
    %v1546 = vpack.c.b16 %v1447, %v1446
    %v1547 = vpack.c.b16 %v1449, %v1448
    %v1548 = vpack.c.b16 %v1451, %v1450
    %v1549 = vpack.c.b16 %v1453, %v1452
    %v1550 = vpack.c.b16 %v1455, %v1454
    %v1551 = vpack.c.b16 %v1457, %v1456
    %v1552 = vpack.c.b16 %v1459, %v1458
    %v1553 = vpack.c.b16 %v1461, %v1460
    %v1554 = vpack.c.b16 %v1463, %v1462
    %v1555 = vpack.c.b16 %v1465, %v1464
    %v1556 = vpack.c.b16 %v1467, %v1466
    %v1557 = vpack.c.b16 %v1469, %v1468
    %v1558 = vpack.c.b16 %v1471, %v1470
    %v1559 = vpack.c.b16 %v1473, %v1472
    %v1560 = vpack.c.b16 %v1475, %v1474
    %v1561 = vpack.c.b16 %v1477, %v1476
    %v1562 = vpack.c.b16 %v1479, %v1478
    %v1563 = vpack.c.b16 %v1481, %v1480
    %v1564 = vpack.c.b16 %v1483, %v1482
    %v1565 = vpack.c.b16 %v1485, %v1484
    %v1566 = vpack.c.b16 %v1487, %v1486
    %v1567 = vpack.c.b16 %v1489, %v1488
    %v1568 = vpack.c.b16 %v1491, %v1490
    %v1569 = vpack.c.b16 %v1493, %v1492
    %v1570 = vpack.c.b16 %v1495, %v1494
    %v1571 = vpack.c.b16 %v1497, %v1496
    %v1572 = vpack.c.b16 %v1499, %v1498
    %v1573 = vpack.c.b16 %v1501, %v1500
    %v1574 = vpack.c.b16 %v1503, %v1502
    %v1575 = vpack.c.b16 %v1505, %v1504
    %v1576 = vpack.c.b16 %v1507, %v1506
    %v1577 = vpack.c.b16 %v1509, %v1508
    %v1578 = vpack.c.b16 %v1511, %v1510
    %v1579 = vpack.c.b16 %v1513, %v1512
    %v1580 = vpack.c.b16 %v1515, %v1514
    %v1581 = vpack.c.b16 %v1517, %v1516
    %1646 = vmatpush.bf16.msra.mxu0 %v1525
    %1647 = vmatpush.bf16.msra.mxu0 %v1524
    %1648 = vmatpush.bf16.msra.mxu0 %v1523
    %1649 = vmatpush.bf16.msra.mxu0 %v1522
    %1650 = vmatpush.bf16.msra.mxu0 %v1521
    %1651 = vmatpush.bf16.msra.mxu0 %v1520
    %1652 = vmatpush.bf16.msra.mxu0 %v1519
    %1653 = vmatpush.bf16.msra.mxu0 %v1518
    %1654 = vmatmul.bf16.gmra.mxu0 %v1096
    %v1655 = vpop.f32.mrf.mxu0
    %v1656 = vadd.f32 %v1260, %v1655
    %v1657 = vpop.f32.mrf.mxu0
    %1658 = vdwg.mxu0
    %1659 = vmatpush.bf16.msra.mxu0 %v1533
    %1660 = vmatpush.bf16.msra.mxu0 %v1532
    %1661 = vmatpush.bf16.msra.mxu0 %v1531
    %1662 = vmatpush.bf16.msra.mxu0 %v1530
    %1663 = vmatpush.bf16.msra.mxu0 %v1529
    %1664 = vmatpush.bf16.msra.mxu0 %v1528
    %1665 = vmatpush.bf16.msra.mxu0 %v1527
    %1666 = vmatpush.bf16.msra.mxu0 %v1526
    %1667 = vmatmul.bf16.gmra.mxu0 %v1097
    %v1668 = vpop.f32.mrf.mxu0
    %v1669 = vadd.f32 %v1656, %v1668
    %v1670 = vpop.f32.mrf.mxu0
    %1671 = vdwg.mxu0
    %1672 = vmatpush.bf16.msra.mxu0 %v1541
    %1673 = vmatpush.bf16.msra.mxu0 %v1540
    %1674 = vmatpush.bf16.msra.mxu0 %v1539
    %1675 = vmatpush.bf16.msra.mxu0 %v1538
    %1676 = vmatpush.bf16.msra.mxu0 %v1537
    %1677 = vmatpush.bf16.msra.mxu0 %v1536
    %1678 = vmatpush.bf16.msra.mxu0 %v1535
    %1679 = vmatpush.bf16.msra.mxu0 %v1534
    %1680 = vmatmul.bf16.gmra.mxu0 %v1098
    %v1681 = vpop.f32.mrf.mxu0
    %v1682 = vadd.f32 %v1669, %v1681
    %v1683 = vpop.f32.mrf.mxu0
    %1684 = vdwg.mxu0
    %1685 = vmatpush.bf16.msra.mxu0 %v1549
    %1686 = vmatpush.bf16.msra.mxu0 %v1548
    %1687 = vmatpush.bf16.msra.mxu0 %v1547
    %1688 = vmatpush.bf16.msra.mxu0 %v1546
    %1689 = vmatpush.bf16.msra.mxu0 %v1545
    %1690 = vmatpush.bf16.msra.mxu0 %v1544
    %1691 = vmatpush.bf16.msra.mxu0 %v1543
    %1692 = vmatpush.bf16.msra.mxu0 %v1542
    %1693 = vmatmul.bf16.gmra.mxu0 %v1099
    %v1694 = vpop.f32.mrf.mxu0
    %v1695 = vadd.f32 %v1682, %v1694
    %v1696 = vpop.f32.mrf.mxu0
    %1697 = vdwg.mxu0
    %1698 = vmatpush.bf16.msra.mxu0 %v1557
    %1699 = vmatpush.bf16.msra.mxu0 %v1556
    %1700 = vmatpush.bf16.msra.mxu0 %v1555
    %1701 = vmatpush.bf16.msra.mxu0 %v1554
    %1702 = vmatpush.bf16.msra.mxu0 %v1553
    %1703 = vmatpush.bf16.msra.mxu0 %v1552
    %1704 = vmatpush.bf16.msra.mxu0 %v1551
    %1705 = vmatpush.bf16.msra.mxu0 %v1550
    %1706 = vmatmul.bf16.gmra.mxu0 %v1100
    %v1707 = vpop.f32.mrf.mxu0
    %v1708 = vadd.f32 %v1695, %v1707
    %v1709 = vpop.f32.mrf.mxu0
    %1710 = vdwg.mxu0
    %1711 = vmatpush.bf16.msra.mxu0 %v1565
    %1712 = vmatpush.bf16.msra.mxu0 %v1564
    %1713 = vmatpush.bf16.msra.mxu0 %v1563
    %1714 = vmatpush.bf16.msra.mxu0 %v1562
    %1715 = vmatpush.bf16.msra.mxu0 %v1561
    %1716 = vmatpush.bf16.msra.mxu0 %v1560
    %1717 = vmatpush.bf16.msra.mxu0 %v1559
    %1718 = vmatpush.bf16.msra.mxu0 %v1558
    %1719 = vmatmul.bf16.gmra.mxu0 %v1101
    %v1720 = vpop.f32.mrf.mxu0
    %v1721 = vadd.f32 %v1708, %v1720
    %v1722 = vpop.f32.mrf.mxu0
    %1723 = vdwg.mxu0
    %1724 = vmatpush.bf16.msra.mxu0 %v1573
    %1725 = vmatpush.bf16.msra.mxu0 %v1572
    %1726 = vmatpush.bf16.msra.mxu0 %v1571
    %1727 = vmatpush.bf16.msra.mxu0 %v1570
    %1728 = vmatpush.bf16.msra.mxu0 %v1569
    %1729 = vmatpush.bf16.msra.mxu0 %v1568
    %1730 = vmatpush.bf16.msra.mxu0 %v1567
    %1731 = vmatpush.bf16.msra.mxu0 %v1566
    %1732 = vmatmul.bf16.gmra.mxu0 %v1102
    %v1733 = vpop.f32.mrf.mxu0
    %v1734 = vadd.f32 %v1721, %v1733
    %v1735 = vpop.f32.mrf.mxu0
    %1736 = vdwg.mxu0
    %1737 = vmatpush.bf16.msra.mxu0 %v1581
    %1738 = vmatpush.bf16.msra.mxu0 %v1580
    %1739 = vmatpush.bf16.msra.mxu0 %v1579
    %1740 = vmatpush.bf16.msra.mxu0 %v1578
    %1741 = vmatpush.bf16.msra.mxu0 %v1577
    %1742 = vmatpush.bf16.msra.mxu0 %v1576
    %1743 = vmatpush.bf16.msra.mxu0 %v1575
    %1744 = vmatpush.bf16.msra.mxu0 %v1574
    %1745 = vmatmul.bf16.gmra.mxu0 %v1103
    %v1746 = vpop.f32.mrf.mxu0
    %v1747 = vadd.f32 %v1734, %v1746
    %v1748 = vpop.f32.mrf.mxu0
    %1749 = vdwg.mxu0
    %v1750 = vld [vmem:[%s3 + $0xd8] sm:$0x1]
    %v1751 = vperm.slane %v1750, 0
    %v1752 = vadd.f32 %v1747, %v1751
    %v1753 = vmax.f32 %v1752, 0.0
    %v1754 = vsel %vm52, %v1753, %v1083
    %v1755 = vld [vmem:[%s4] sm:$0xff]
    %v1756 = vld [vmem:[%s4 + $0x8] sm:$0xff]
    %v1757 = vld [vmem:[%s4 + $0x10] sm:$0xff]
    %v1758 = vld [vmem:[%s4 + $0x18] sm:$0xff]
    %v1759 = vld [vmem:[%s4 + $0x20] sm:$0xff]
    %v1760 = vld [vmem:[%s4 + $0x28] sm:$0xff]
    %v1761 = vld [vmem:[%s4 + $0x30] sm:$0xff]
    %v1762 = vld [vmem:[%s4 + $0x38] sm:$0xff]
    %v1763 = vld [vmem:[%s4 + $0x40] sm:$0xff]
    %v1764 = vld [vmem:[%s4 + $0x48] sm:$0xff]
    %v1765 = vld [vmem:[%s4 + $0x50] sm:$0xff]
    %v1766 = vld [vmem:[%s4 + $0x58] sm:$0xff]
    %v1767 = vld [vmem:[%s4 + $0x60] sm:$0xff]
    %v1768 = vld [vmem:[%s4 + $0x68] sm:$0xff]
    %v1769 = vld [vmem:[%s4 + $0x70] sm:$0xff]
    %v1770 = vld [vmem:[%s4 + $0x78] sm:$0xff]
    %v1771 = vld [vmem:[%s4 + $0x120] sm:$0x1]
    %v1772 = vperm.slane %v1771, 0
    %1773 = vmatpush.msra.mxu0 %v1770
    %1774 = vmatpush.msra.mxu0 %v1769
    %1775 = vmatpush.msra.mxu0 %v1768
    %1776 = vmatpush.msra.mxu0 %v1767
    %1777 = vmatpush.msra.mxu0 %v1766
    %1778 = vmatpush.msra.mxu0 %v1765
    %1779 = vmatpush.msra.mxu0 %v1764
    %1780 = vmatpush.msra.mxu0 %v1763
    %1781 = vmatpush.msra.mxu0 %v1762
    %1782 = vmatpush.msra.mxu0 %v1761
    %1783 = vmatpush.msra.mxu0 %v1760
    %1784 = vmatpush.msra.mxu0 %v1759
    %1785 = vmatpush.msra.mxu0 %v1758
    %1786 = vmatpush.msra.mxu0 %v1757
    %1787 = vmatpush.msra.mxu0 %v1756
    %1788 = vmatpush.msra.mxu0 %v1755
    %1789 = vmatmul.f32.gmra.mxu0 %v1754
    %v1790 = vpop.f32.mrf.mxu0
    %v1791 = vadd.f32 %v1772, %v1790
    %1792 = vdwg.mxu0
    %v1793 = vmax.f32 %v1791, 0.0
    %v1794 = vld [vmem:[%s5] sm:$0xff]
    %v1795 = vld [vmem:[%s5 + $0x8] sm:$0xff]
    %v1796 = vld [vmem:[%s5 + $0x10] sm:$0xff]
    %v1797 = vld [vmem:[%s5 + $0x18] sm:$0xff]
    %v1798 = vld [vmem:[%s5 + $0x20] sm:$0xff]
    %v1799 = vld [vmem:[%s5 + $0x28] sm:$0xff]
    %v1800 = vld [vmem:[%s5 + $0x30] sm:$0xff]
    %v1801 = vld [vmem:[%s5 + $0x38] sm:$0xff]
    %v1802 = vld [vmem:[%s5 + $0x40] sm:$0xff]
    %v1803 = vld [vmem:[%s5 + $0x48] sm:$0xff]
    %v1804 = vld [vmem:[%s5 + $0x50] sm:$0xff]
    %v1805 = vld [vmem:[%s5 + $0x58] sm:$0xff]
    %v1806 = vld [vmem:[%s5 + $0x60] sm:$0xff]
    %v1807 = vld [vmem:[%s5 + $0x68] sm:$0xff]
    %v1808 = vld [vmem:[%s5 + $0x70] sm:$0xff]
    %v1809 = vld [vmem:[%s5 + $0x78] sm:$0xff]
    %v1810 = vld [vmem:[%s5 + $0x80] sm:$0xff]
    %v1811 = vld [vmem:[%s5 + $0x88] sm:$0xff]
    %v1812 = vld [vmem:[%s5 + $0x90] sm:$0xff]
    %v1813 = vld [vmem:[%s5 + $0x98] sm:$0xff]
    %v1814 = vld [vmem:[%s5 + $0xa0] sm:$0xff]
    %v1815 = vld [vmem:[%s5 + $0xa8] sm:$0xff]
    %v1816 = vld [vmem:[%s5 + $0xb0] sm:$0xff]
    %v1817 = vld [vmem:[%s5 + $0xb8] sm:$0xff]
    %v1818 = vld [vmem:[%s5 + $0xc0] sm:$0xff]
    %v1819 = vld [vmem:[%s5 + $0xc8] sm:$0xff]
    %v1820 = vld [vmem:[%s5 + $0xd0] sm:$0xff]
    %v1821 = vld [vmem:[%s5 + $0xd8] sm:$0xff]
    %v1822 = vld [vmem:[%s5 + $0xe0] sm:$0xff]
    %v1823 = vld [vmem:[%s5 + $0xe8] sm:$0xff]
    %v1824 = vld [vmem:[%s5 + $0xf0] sm:$0xff]
    %v1825 = vld [vmem:[%s5 + $0xf8] sm:$0xff]
    %s1826 = scalar_lea.vmem %s5, 256
    %v1827 = vld [vmem:[%s1826] ss:$8 sm:$0x3]
    %v1829 = vperm.slane %v1827, 0
    %v1830 = vperm.slane %v1827, 1
    %1833 = vmatpush.msra.mxu0 %v1824
    %1834 = vmatpush.msra.mxu0 %v1822
    %1835 = vmatpush.msra.mxu0 %v1820
    %1836 = vmatpush.msra.mxu0 %v1818
    %1837 = vmatpush.msra.mxu0 %v1816
    %1838 = vmatpush.msra.mxu0 %v1814
    %1839 = vmatpush.msra.mxu0 %v1812
    %1840 = vmatpush.msra.mxu0 %v1810
    %1841 = vmatpush.msra.mxu0 %v1808
    %1842 = vmatpush.msra.mxu0 %v1806
    %1843 = vmatpush.msra.mxu0 %v1804
    %1844 = vmatpush.msra.mxu0 %v1802
    %1845 = vmatpush.msra.mxu0 %v1800
    %1846 = vmatpush.msra.mxu0 %v1798
    %1847 = vmatpush.msra.mxu0 %v1796
    %1848 = vmatpush.msra.mxu0 %v1794
    %1849 = vmatmul.f32.gmra.mxu0 %v1793
    %v1850 = vpop.f32.mrf.mxu0
    %v1851 = vadd.f32 %v1829, %v1850
    %1852 = vdwg.mxu0
    %1853 = vmatpush.msra.mxu0 %v1825
    %1854 = vmatpush.msra.mxu0 %v1823
    %1855 = vmatpush.msra.mxu0 %v1821
    %1856 = vmatpush.msra.mxu0 %v1819
    %1857 = vmatpush.msra.mxu0 %v1817
    %1858 = vmatpush.msra.mxu0 %v1815
    %1859 = vmatpush.msra.mxu0 %v1813
    %1860 = vmatpush.msra.mxu0 %v1811
    %1861 = vmatpush.msra.mxu0 %v1809
    %1862 = vmatpush.msra.mxu0 %v1807
    %1863 = vmatpush.msra.mxu0 %v1805
    %1864 = vmatpush.msra.mxu0 %v1803
    %1865 = vmatpush.msra.mxu0 %v1801
    %1866 = vmatpush.msra.mxu0 %v1799
    %1867 = vmatpush.msra.mxu0 %v1797
    %1868 = vmatpush.msra.mxu0 %v1795
    %1869 = vmatmul.f32.gmra.mxu0 %v1793
    %v1870 = vpop.f32.mrf.mxu0
    %v1871 = vadd.f32 %v1830, %v1870
    %1872 = vdwg.mxu0
    %v1873 = vxor.u32 %v1851, 2147483648
    %v1874 = vxor.u32 %v1871, 2147483648
    %v1875 = vmul.f32 %v1873, 1.442695
    %v1876 = vpow.pop %v1875
    %v1877 = vmul.f32 %v1874, 1.442695
    %v1878 = vpow.pop %v1877
    %v1879 = vadd.f32 %v1876, 1.0
    %v1880 = vadd.f32 %v1878, 1.0
    %v1881 = vrcp.pop %v1879
    %v1882 = vmul.f32 %v1879, %v1881
    %v1883 = vsub.f32 1.0, %v1882
    %v1884 = vmul.f32 %v1881, %v1883
    %v1885 = vadd.f32 %v1881, %v1884
    %vm1886 = vweird.f32 %v1879
    %vm1887 = vweird.f32 %v1881
    %vm1888 = vmor %vm1886, %vm1887
    %v1889 = vsel %vm1888, %v1881, %v1885
    %v1890 = vand.u32 2147483647, %v1879
    %vm1891 = vcmp.eq.f32.partialorder %v1890, 8.507059e+37
    %v1892 = vand.u32 %v1879, 2147483648
    %v1893 = vor.u32 1.1754944e-38, %v1892
    %v1894 = vsel %vm1891, %v1893, %v1889
    %v1895 = vmul.f32 1.0, %v1894
    %v1896 = vrcp.pop %v1880
    %v1897 = vmul.f32 %v1880, %v1896
    %v1898 = vsub.f32 1.0, %v1897
    %v1899 = vmul.f32 %v1896, %v1898
    %v1900 = vadd.f32 %v1896, %v1899
    %vm1901 = vweird.f32 %v1880
    %vm1902 = vweird.f32 %v1896
    %vm1903 = vmor %vm1901, %vm1902
    %v1904 = vsel %vm1903, %v1896, %v1900
    %v1905 = vand.u32 2147483647, %v1880
    %vm1906 = vcmp.eq.f32.partialorder %v1905, 8.507059e+37
    %v1907 = vand.u32 %v1880, 2147483648
    %v1908 = vor.u32 1.1754944e-38, %v1907
    %v1909 = vsel %vm1906, %v1908, %v1904
    %v1910 = vmul.f32 1.0, %v1909
    %v1911 = vmul.f32 %v1754, %v1895
    %v1912 = vld [vmem:[%s4 + $0x80] sm:$0xff]
    %v1913 = vld [vmem:[%s4 + $0x88] sm:$0xff]
    %v1914 = vld [vmem:[%s4 + $0x90] sm:$0xff]
    %v1915 = vld [vmem:[%s4 + $0x98] sm:$0xff]
    %v1916 = vld [vmem:[%s4 + $0xa0] sm:$0xff]
    %v1917 = vld [vmem:[%s4 + $0xa8] sm:$0xff]
    %v1918 = vld [vmem:[%s4 + $0xb0] sm:$0xff]
    %v1919 = vld [vmem:[%s4 + $0xb8] sm:$0xff]
    %v1920 = vld [vmem:[%s4 + $0xc0] sm:$0xff]
    %v1921 = vld [vmem:[%s4 + $0xc8] sm:$0xff]
    %v1922 = vld [vmem:[%s4 + $0xd0] sm:$0xff]
    %v1923 = vld [vmem:[%s4 + $0xd8] sm:$0xff]
    %v1924 = vld [vmem:[%s4 + $0xe0] sm:$0xff]
    %v1925 = vld [vmem:[%s4 + $0xe8] sm:$0xff]
    %v1926 = vld [vmem:[%s4 + $0xf0] sm:$0xff]
    %v1927 = vld [vmem:[%s4 + $0xf8] sm:$0xff]
    %v1928 = vld [vmem:[%s4 + $0x100] sm:$0xff]
    %v1929 = vld [vmem:[%s4 + $0x108] sm:$0xff]
    %v1930 = vld [vmem:[%s4 + $0x110] sm:$0xff]
    %v1931 = vld [vmem:[%s4 + $0x118] sm:$0xff]
    %v1932 = vld [vmem:[%s4 + $0x128] sm:$0x1]
    %v1933 = vperm.slane %v1932, 0
    %v1935 = vsel %vm158, %v1910, 0
    %1937 = vmatpush.msra.mxu0 %v1927
    %1938 = vmatpush.msra.mxu0 %v1926
    %1939 = vmatpush.msra.mxu0 %v1925
    %1940 = vmatpush.msra.mxu0 %v1924
    %1941 = vmatpush.msra.mxu0 %v1923
    %1942 = vmatpush.msra.mxu0 %v1922
    %1943 = vmatpush.msra.mxu0 %v1921
    %1944 = vmatpush.msra.mxu0 %v1920
    %1945 = vmatpush.msra.mxu0 %v1919
    %1946 = vmatpush.msra.mxu0 %v1918
    %1947 = vmatpush.msra.mxu0 %v1917
    %1948 = vmatpush.msra.mxu0 %v1916
    %1949 = vmatpush.msra.mxu0 %v1915
    %1950 = vmatpush.msra.mxu0 %v1914
    %1951 = vmatpush.msra.mxu0 %v1913
    %1952 = vmatpush.msra.mxu0 %v1912
    %1953 = vmatmul.f32.gmra.mxu0 %v1911
    %v1954 = vpop.f32.mrf.mxu0
    %v1955 = vadd.f32 %v1933, %v1954
    %1956 = vdwg.mxu0
    %1957 = vmatpush.msra.mxu0 0.0
    %1958 = vmatpush.msra.mxu0 0.0
    %1959 = vmatpush.msra.mxu0 0.0
    %1960 = vmatpush.msra.mxu0 0.0
    %1961 = vmatpush.msra.mxu0 0.0
    %1962 = vmatpush.msra.mxu0 0.0
    %1963 = vmatpush.msra.mxu0 0.0
    %1964 = vmatpush.msra.mxu0 0.0
    %1965 = vmatpush.msra.mxu0 0.0
    %1966 = vmatpush.msra.mxu0 0.0
    %1967 = vmatpush.msra.mxu0 0.0
    %1968 = vmatpush.msra.mxu0 0.0
    %1969 = vmatpush.msra.mxu0 %v1931
    %1970 = vmatpush.msra.mxu0 %v1930
    %1971 = vmatpush.msra.mxu0 %v1929
    %1972 = vmatpush.msra.mxu0 %v1928
    %1973 = vmatmul.f32.gmra.mxu0 %v1935
    %v1974 = vpop.f32.mrf.mxu0
    %v1975 = vadd.f32 %v1955, %v1974
    %1976 = vdwg.mxu0
    %v1977 = vmax.f32 %v1975, 0.0
    %1978 = vst [vmem:[#allocation2] sm:$0xff] %v1977
    // Predicated region
    $region26: #{tpu_custom_call.1} parent=1 // pred_check
      _
    $region27: #{tpu_custom_call.1} parent=1 // pred_check_branch
      %1980 = sbr.rel (0) target = $region29
    $region28: #{tpu_custom_call.1} parent=1 // pred_region
      %1982 = vsyncadd [#allocation3], 0
      %s1984 = sshll.u32 [#allocation2], 4
      %s1985 = int_to_ptr.vmem [resolvable:$true] %s1984
      %s1986 = sshll.u32 %s6, 4
      %s1987 = int_to_ptr.hbm [resolvable:$true] %s1986
      %1989 = dma.vmem_to_hbm [thread:$0]  %s1985, 128, %s1987, [#allocation3]
    $region29: #{tpu_custom_call.1} parent=1 // pred_fallthru
      _
    // Predicated region
    $region30: #{tpu_custom_call.1} parent=1 // pred_check
      _
    $region31: #{tpu_custom_call.1} parent=1 // pred_check_branch
      %1991 = sbr.rel (0) target = $region33
    $region32: #{tpu_custom_call.1} parent=1 // pred_region
      %1993 = dma.done [#allocation3], 128
    $region33: #{tpu_custom_call.1} parent=1 // pred_fallthru
      _
    %1994 = vsyncpa [#allocation3], 1

</llo_original>
